<compile_context>
chip_gen: v7x
topology: tpu7x:2x2x1
jax: 0.10.0
libtpu: 0.0.40
codegen_flags: <defaults>
</compile_context>

<pallas_src>
import functools

import jax
import jax.numpy as jnp
from jax.experimental import pallas as pl
from jax.experimental.pallas import tpu as pltpu


def _round_up(v, m):
    return -(-v // m) * m


def coordatt_kernel(x_ref, pool_ref, inv_ref, ehT_ref, ewT_ref,
                    w1t_ref, b1_ref, wcat_ref, bcat_ref, out_ref,
                    *, c, h, w, hp):
    """One batch-block of CoordAtt.

    x_ref / out_ref : (nb*c, S) lane-dense blocks (S = H*W), native dtype.
    pool_ref        : (S, Tp)   0/1 pooling indicator (Tp = Hp+Wp, 8-aligned).
    inv_ref         : (1, Tp)   f32 column scales (1/W for h-part, 1/H for w-part).
    ehT_ref/ewT_ref : (H, S) / (W, S) 0/1 gate-expansion indicators.
    w1t_ref, b1_ref : conv1 (+BN folded), (c, mip) / (1, mip), f32.
    wcat_ref, bcat  : fused [conv_h | conv_w], (mip, 2c) / (1, 2c), f32.
    """
    nb = x_ref.shape[0] // c
    mip = w1t_ref.shape[1]
    tp = pool_ref.shape[1]

    xf = x_ref[...]                                           # native dtype (bf16/f32)

    # Both adaptive average pools: one flattened indicator matmul on the MXU
    # with f32 accumulation, then exact f32 column scaling.
    d = jnp.dot(xf, pool_ref[...], preferred_element_type=jnp.float32)   # (nb*c, Tp)
    d = d * inv_ref[...]

    # conv1 (1x1, BN folded) + ReLU on the fused (H|W) descriptor.
    d3 = d.reshape(nb, c, tp)                                 # aligned split (c % 8 == 0)
    y = jnp.einsum('bct,cm->btm', d3, w1t_ref[...],
                   preferred_element_type=jnp.float32)        # (nb, Tp, mip)
    y = jnp.maximum(y + b1_ref[...][None], 0.0)

    # Fused conv_h | conv_w as one flattened matmul, then sigmoid gates in the
    # native dtype (bf16 gates on bf16 inputs).
    z = jnp.dot(y.reshape(nb * tp, mip), wcat_ref[...],
                preferred_element_type=jnp.float32) + bcat_ref[...]      # (nb*Tp, 2c)
    a = jax.nn.sigmoid(z).astype(xf.dtype).reshape(nb, tp, 2 * c)

    a_h = a[:, :h, :c]                                        # (nb, H, c)
    a_w = a[:, hp:hp + w, c:]                                 # (nb, W, c)

    # Channel-first + batch-flattened gates -> single 2-D expansion matmuls.
    ah = jnp.swapaxes(a_h, 1, 2).reshape(nb * c, h)           # (nb*c, H)
    aw = jnp.swapaxes(a_w, 1, 2).reshape(nb * c, w)           # (nb*c, W)

    # Expand gates back onto the lane-dense grid on the MXU; multiply one gate
    # at a time so g_h and g_w are never both live at full block size.
    g_h = jnp.dot(ah, ehT_ref[...])                           # (nb*c, S), native dtype
    out = xf * g_h
    g_w = jnp.dot(aw, ewT_ref[...])                           # (nb*c, S)
    out_ref[...] = (out * g_w).astype(out_ref.dtype)


def _pick_batch_block(n, per_elem_bytes, budget_bytes, min_grid_steps=4):
    """Largest per-step batch block that fits the VMEM budget and keeps at
    least min(min_grid_steps, n) grid steps (megacore feed / pipeline depth)."""
    cap = max(1, min(n, int(budget_bytes) // max(int(per_elem_bytes), 1)))
    target = min(min_grid_steps, n)
    if target > 1:
        cap = min(cap, max(1, (n - 1) // (target - 1)))
    best_div = max(d for d in range(1, cap + 1) if n % d == 0)
    # Accept a ragged last block (cdiv grid) only if it buys a much larger tile.
    return cap if cap > 2 * best_div else best_div


def coord_att(x, params, *, min_grid_steps=4):
    """x: (N, C, H, W). params: dict from make_params (BN already folded)."""
    n, c, h, w = x.shape
    w1, b1 = params["w1"], params["b1"]          # (mip, C), (1, mip)
    wh, bh = params["wh"], params["bh"]          # (oup, mip), (1, oup)
    ww, bw = params["ww"], params["bw"]          # (oup, mip), (1, oup)
    mip, oup = w1.shape[0], wh.shape[0]
    assert oup == c, "CoordAtt final gating multiply requires oup == inp"

    s = h * w
    dt = x.dtype
    itemsize = jnp.dtype(dt).itemsize

    # Pad channels / descriptor length to sublane multiples so every in-kernel
    # reshape & slice is tile aligned (real nets: C, H, W already multiples of 8).
    cp, hp, wp = _round_up(c, 8), _round_up(h, 8), _round_up(w, 8)
    tp = hp + wp

    x3 = x.reshape(n, c, s)
    if cp != c:
        x3 = jnp.pad(x3, ((0, 0), (0, cp - c), (0, 0)))
    x2 = x3.reshape(n * cp, s)

    # Constant indicator matrices (exact 0/1, safe in bf16 too); 1/W and 1/H
    # stay in f32 so the averaging is exact regardless of x's dtype.
    row = jnp.arange(s)
    eh = (row[:, None] // w == jnp.arange(h)[None, :]).astype(dt)    # (S, H)
    ew = (row[:, None] % w == jnp.arange(w)[None, :]).astype(dt)     # (S, W)
    pool_ind = jnp.zeros((s, tp), dt).at[:, :h].set(eh).at[:, hp:hp + w].set(ew)
    inv_row = (jnp.zeros((1, tp), jnp.float32)
               .at[:, :h].set(1.0 / w).at[:, hp:hp + w].set(1.0 / h))
    ehT, ewT = eh.T, ew.T                                            # (H, S), (W, S)

    # Pre-transposed / channel-padded / fused weights (tiny, kept in f32).
    w1f = w1.astype(jnp.float32)
    whf, bhf = wh.astype(jnp.float32), bh.astype(jnp.float32)
    wwf, bwf = ww.astype(jnp.float32), bw.astype(jnp.float32)
    if cp != c:
        w1f = jnp.pad(w1f, ((0, 0), (0, cp - c)))
        whf = jnp.pad(whf, ((0, cp - c), (0, 0)))
        wwf = jnp.pad(wwf, ((0, cp - c), (0, 0)))
        bhf = jnp.pad(bhf, ((0, 0), (0, cp - c)))
        bwf = jnp.pad(bwf, ((0, 0), (0, cp - c)))
    w1t = w1f.T                                                      # (Cp, mip)
    b1f = b1.astype(jnp.float32)                                     # (1, mip)
    wcat = jnp.concatenate([whf.T, wwf.T], axis=1)                   # (mip, 2*Cp)
    bcat = jnp.concatenate([bhf, bwf], axis=1)                       # (1, 2*Cp)

    # ---- VMEM budgeting: honest per-step footprint, per-generation cap.
    try:
        phys_vmem = int(pltpu.get_tpu_info().vmem_capacity_bytes)
    except Exception:
        phys_vmem = 64 * 1024 * 1024                 # v7x-safe fallback
    vmem_limit = (phys_vmem * 3) // 4                # ~48 MiB v7x, ~96 MiB v5e/v6e

    per_elem = (4 * cp * s * itemsize                # 2x double-buffered in + 2x out
                + 3 * cp * s * itemsize              # gate tensors / staged product
                + 4 * cp * tp * 4                    # pooled descriptor intermediates
                + tp * (mip + 2 * cp) * 4)           # y / z / a (f32)
    const_bytes = ((pool_ind.size + ehT.size + ewT.size) * itemsize
                   + (w1t.size + b1f.size + wcat.size + bcat.size) * 4)
    margin = 2 << 20
    if const_bytes + per_elem + margin > vmem_limit:
        # TODO(synk): for very large C*S switch to a two-pass structure (tiny
        # gate-producing kernel + C/S-tiled gating kernel) instead of growing
        # the limit toward physical VMEM.
        vmem_limit = min(phys_vmem, const_bytes + per_elem + margin)
    budget = vmem_limit - const_bytes - margin
    nb = _pick_batch_block(n, per_elem, budget, min_grid_steps=min_grid_steps)
    grid = (pl.cdiv(n, nb),)

    kern = functools.partial(coordatt_kernel, c=cp, h=h, w=w, hp=hp)
    consts = (pool_ind, inv_row, ehT, ewT, w1t, b1f, wcat, bcat)

    def _const_spec(shape, single_buffer):
        if single_buffer:
            return pl.BlockSpec(shape, lambda i: (0,) * len(shape),
                                pipeline_mode=pl.Buffered(1))
        return pl.BlockSpec(shape, lambda i: (0,) * len(shape))

    def _call(single_buffer_consts):
        in_specs = ([pl.BlockSpec((nb * cp, s), lambda i: (i, 0))]
                    + [_const_spec(a.shape, single_buffer_consts) for a in consts])
        return pl.pallas_call(
            kern,
            out_shape=jax.ShapeDtypeStruct((n * cp, s), dt),
            grid=grid,
            in_specs=in_specs,
            out_specs=pl.BlockSpec((nb * cp, s), lambda i: (i, 0)),
            compiler_params=pltpu.CompilerParams(
                dimension_semantics=("parallel",),
                vmem_limit_bytes=int(vmem_limit)),
        )(x2, *consts)

    try:
        out2 = _call(True)       # constants single-buffered (constant index_map)
    except Exception:
        out2 = _call(False)      # fall back to default double buffering

    out3 = out2.reshape(n, cp, s)
    if cp != c:
        out3 = out3[:, :c, :]
    return out3.reshape(n, c, h, w)


def make_params(key, inp, oup, reduction=32):
    """Deterministic synthetic parameters matching CoordAtt.__init__ shapes,
    with eval-mode BatchNorm folded into conv1."""
    mip = max(8, inp // reduction)
    ks = jax.random.split(key, 10)
    conv1_w = jax.random.normal(ks[0], (mip, inp), jnp.float32) * 0.1
    conv1_b = jax.random.normal(ks[1], (mip,), jnp.float32) * 0.1
    convh_w = jax.random.normal(ks[2], (oup, mip), jnp.float32) * 0.1
    convh_b = jax.random.normal(ks[3], (oup,), jnp.float32) * 0.1
    convw_w = jax.random.normal(ks[4], (oup, mip), jnp.float32) * 0.1
    convw_b = jax.random.normal(ks[5], (oup,), jnp.float32) * 0.1
    bn_gamma = 1.0 + 0.1 * jax.random.normal(ks[6], (mip,), jnp.float32)
    bn_beta = 0.1 * jax.random.normal(ks[7], (mip,), jnp.float32)
    bn_mean = 0.1 * jax.random.normal(ks[8], (mip,), jnp.float32)
    bn_var = jnp.abs(1.0 + 0.1 * jax.random.normal(ks[9], (mip,), jnp.float32))
    eps = 1e-5

    # Fold BN (eval mode) into conv1:  bn(conv1(x)) = w1' x + b1'
    scale = bn_gamma / jnp.sqrt(bn_var + eps)                   # (mip,)
    w1 = conv1_w * scale[:, None]                               # (mip, inp)
    b1 = (conv1_b - bn_mean) * scale + bn_beta                  # (mip,)

    return {
        "w1": w1,
        "b1": b1[None, :],          # (1, mip)
        "wh": convh_w,
        "bh": convh_b[None, :],     # (1, oup)
        "ww": convw_w,
        "bw": convw_b[None, :],     # (1, oup)
    }


def coord_att_reference(x, params):
    """Pure-JAX reference mirroring the PyTorch forward (BN folded)."""
    n, c, h, w = x.shape
    x_h = jnp.mean(x, axis=3)                                   # (N, C, H)
    x_w = jnp.mean(x, axis=2)                                   # (N, C, W)
    y = jnp.concatenate([x_h, x_w], axis=2)                     # (N, C, H+W)
    y = jnp.einsum('mc,nct->nmt', params["w1"], y)
    y = y + params["b1"][0][None, :, None]
    y = jnp.maximum(y, 0.0)
    y_h, y_w = y[:, :, :h], y[:, :, h:]
    a_h = jax.nn.sigmoid(jnp.einsum('om,nmh->noh', params["wh"], y_h)
                         + params["bh"][0][None, :, None])      # (N, oup, H)
    a_w = jax.nn.sigmoid(jnp.einsum('om,nmw->now', params["ww"], y_w)
                         + params["bw"][0][None, :, None])      # (N, oup, W)
    return x * a_h[:, :, :, None] * a_w[:, :, None, :]


if __name__ == "__main__":
    # NOTE: the spec module uses plain ReLU + exact sigmoid (not h_swish /
    # h_sigmoid), which this kernel matches.
    # TODO(synk): training-mode BatchNorm (batch statistics) is not modeled;
    # eval-mode running stats are folded into conv1 outside the kernel.
    inp = oup = 4            # CoordAtt's final multiply requires oup == inp
    n, h, w = 2, 16, 16

    key = jax.random.PRNGKey(0)
    kx, kp = jax.random.split(key)
    x = jax.random.normal(kx, (n, inp, h, w), jnp.float32)
    params = make_params(kp, inp, oup, reduction=32)

    out = jax.block_until_ready(coord_att(x, params))
    ref = coord_att_reference(x, params)
    assert out.shape == (n, oup, h, w)
    assert jnp.allclose(out, ref, rtol=1e-4, atol=1e-5), "f32 mismatch vs reference"

    # bf16 end-to-end path (native-dtype HBM traffic; f32 accumulation inside).
    xb = x.astype(jnp.bfloat16)
    outb = jax.block_until_ready(coord_att(xb, params))
    refb = coord_att_reference(xb.astype(jnp.float32), params)
    assert outb.dtype == jnp.bfloat16
    assert jnp.allclose(outb.astype(jnp.float32), refb, rtol=3e-2, atol=3e-2), \
        "bf16 mismatch vs reference"

    print("KERNEL_OK")
</pallas_src>

<mosaic_0001>
module attributes {stable_mosaic.version = 11 : i64} {
  func.func @coordatt_kernel(%arg0: i32, %arg1: memref<8x256xf32, #tpu.memory_space<vmem>>, %arg2: memref<256x32xf32, #tpu.memory_space<vmem>>, %arg3: memref<1x32xf32, #tpu.memory_space<vmem>>, %arg4: memref<16x256xf32, #tpu.memory_space<vmem>>, %arg5: memref<16x256xf32, #tpu.memory_space<vmem>>, %arg6: memref<8x8xf32, #tpu.memory_space<vmem>>, %arg7: memref<1x8xf32, #tpu.memory_space<vmem>>, %arg8: memref<8x16xf32, #tpu.memory_space<vmem>>, %arg9: memref<1x16xf32, #tpu.memory_space<vmem>>, %arg10: memref<8x256xf32, #tpu.memory_space<vmem>>) attributes {dimension_semantics = [#tpu.dimension_semantics<parallel>], iteration_bounds = array<i64: 2>, scalar_prefetch = 0 : i64, scratch_operands = 0 : i64, tpu.core_type = #tpu.core_type<tc>, window_params = [{transform_indices = @transform_0, window_bounds = array<i64: 8, 256>}, {pipeline_mode = #tpu.pipeline_mode<synchronous>, transform_indices = @transform_1, window_bounds = array<i64: 256, 32>}, {pipeline_mode = #tpu.pipeline_mode<synchronous>, transform_indices = @transform_2, window_bounds = array<i64: 1, 32>}, {pipeline_mode = #tpu.pipeline_mode<synchronous>, transform_indices = @transform_3, window_bounds = array<i64: 16, 256>}, {pipeline_mode = #tpu.pipeline_mode<synchronous>, transform_indices = @transform_4, window_bounds = array<i64: 16, 256>}, {pipeline_mode = #tpu.pipeline_mode<synchronous>, transform_indices = @transform_5, window_bounds = array<i64: 8, 8>}, {pipeline_mode = #tpu.pipeline_mode<synchronous>, transform_indices = @transform_6, window_bounds = array<i64: 1, 8>}, {pipeline_mode = #tpu.pipeline_mode<synchronous>, transform_indices = @transform_7, window_bounds = array<i64: 8, 16>}, {pipeline_mode = #tpu.pipeline_mode<synchronous>, transform_indices = @transform_8, window_bounds = array<i64: 1, 16>}, {transform_indices = @transform_9, window_bounds = array<i64: 8, 256>}]} {
    %c0 = arith.constant 0 : index
    %c0_0 = arith.constant 0 : index
    %0 = vector.load %arg1[%c0, %c0_0] : memref<8x256xf32, #tpu.memory_space<vmem>>, vector<8x256xf32>
    %c0_1 = arith.constant 0 : index
    %c0_2 = arith.constant 0 : index
    %1 = vector.load %arg2[%c0_1, %c0_2] : memref<256x32xf32, #tpu.memory_space<vmem>>, vector<256x32xf32>
    %cst = arith.constant dense<0.000000e+00> : vector<8x32xf32>
    %2 = tpu.matmul %0, %1, %cst {dimension_numbers = #tpu.dot_dimension_numbers<[1], [0], [0], [1], [0, 0, 1, 1], [], []>} : vector<8x256xf32>, vector<256x32xf32>, vector<8x32xf32> -> vector<8x32xf32>
    %c0_3 = arith.constant 0 : index
    %c0_4 = arith.constant 0 : index
    %3 = vector.load %arg3[%c0_3, %c0_4] : memref<1x32xf32, #tpu.memory_space<vmem>>, vector<1x32xf32>
    %4 = vector.broadcast %3 : vector<1x32xf32> to vector<8x32xf32>
    %5 = arith.mulf %2, %4 : vector<8x32xf32>
    %6 = vector.shape_cast %5 : vector<8x32xf32> to vector<1x8x32xf32>
    %c0_5 = arith.constant 0 : index
    %c0_6 = arith.constant 0 : index
    %7 = vector.load %arg6[%c0_5, %c0_6] : memref<8x8xf32, #tpu.memory_space<vmem>>, vector<8x8xf32>
    "tpu.trace_start"() <{level = 10 : i32, message = "bct,cm->btm"}> : () -> ()
    %cst_7 = arith.constant dense<0.000000e+00> : vector<1x32x8xf32>
    %8 = tpu.matmul %6, %7, %cst_7 {dimension_numbers = #tpu.dot_dimension_numbers<[1], [0], [0, 2], [1], [0, 0, 0, 2, 1, 1], [], []>} : vector<1x8x32xf32>, vector<8x8xf32>, vector<1x32x8xf32> -> vector<1x32x8xf32>
    "tpu.trace_stop"() : () -> ()
    %c0_8 = arith.constant 0 : index
    %c0_9 = arith.constant 0 : index
    %9 = vector.load %arg7[%c0_8, %c0_9] : memref<1x8xf32, #tpu.memory_space<vmem>>, vector<1x8xf32>
    %10 = vector.shape_cast %9 : vector<1x8xf32> to vector<1x1x8xf32>
    %11 = vector.broadcast %10 : vector<1x1x8xf32> to vector<1x32x8xf32>
    %12 = arith.addf %8, %11 : vector<1x32x8xf32>
    %cst_10 = arith.constant 0.000000e+00 : f32
    %13 = vector.broadcast %cst_10 : f32 to vector<1x32x8xf32>
    %14 = arith.maximumf %12, %13 : vector<1x32x8xf32>
    %15 = vector.shape_cast %14 : vector<1x32x8xf32> to vector<32x8xf32>
    %c0_11 = arith.constant 0 : index
    %c0_12 = arith.constant 0 : index
    %16 = vector.load %arg8[%c0_11, %c0_12] : memref<8x16xf32, #tpu.memory_space<vmem>>, vector<8x16xf32>
    %cst_13 = arith.constant dense<0.000000e+00> : vector<32x16xf32>
    %17 = tpu.matmul %15, %16, %cst_13 {dimension_numbers = #tpu.dot_dimension_numbers<[1], [0], [0], [1], [0, 0, 1, 1], [], []>} : vector<32x8xf32>, vector<8x16xf32>, vector<32x16xf32> -> vector<32x16xf32>
    %c0_14 = arith.constant 0 : index
    %c0_15 = arith.constant 0 : index
    %18 = vector.load %arg9[%c0_14, %c0_15] : memref<1x16xf32, #tpu.memory_space<vmem>>, vector<1x16xf32>
    %19 = vector.broadcast %18 : vector<1x16xf32> to vector<32x16xf32>
    %20 = arith.addf %17, %19 : vector<32x16xf32>
    %21 = arith.negf %20 : vector<32x16xf32>
    %22 = math.exp %21 : vector<32x16xf32>
    %cst_16 = arith.constant 1.000000e+00 : f32
    %23 = vector.broadcast %cst_16 : f32 to vector<32x16xf32>
    %24 = arith.addf %23, %22 : vector<32x16xf32>
    %25 = arith.divf %23, %24 : vector<32x16xf32>
    %26 = vector.shape_cast %25 : vector<32x16xf32> to vector<1x32x16xf32>
    %27 = vector.extract_strided_slice %26 {offsets = [0, 0, 0], sizes = [1, 16, 8], strides = [1, 1, 1]} : vector<1x32x16xf32> to vector<1x16x8xf32>
    %28 = vector.extract_strided_slice %26 {offsets = [0, 16, 8], sizes = [1, 16, 8], strides = [1, 1, 1]} : vector<1x32x16xf32> to vector<1x16x8xf32>
    %29 = tpu.transpose %27, [0, 2, 1] : vector<1x16x8xf32> -> vector<1x8x16xf32>
    %30 = vector.shape_cast %29 : vector<1x8x16xf32> to vector<8x16xf32>
    %31 = tpu.transpose %28, [0, 2, 1] : vector<1x16x8xf32> -> vector<1x8x16xf32>
    %32 = vector.shape_cast %31 : vector<1x8x16xf32> to vector<8x16xf32>
    %c0_17 = arith.constant 0 : index
    %c0_18 = arith.constant 0 : index
    %33 = vector.load %arg4[%c0_17, %c0_18] : memref<16x256xf32, #tpu.memory_space<vmem>>, vector<16x256xf32>
    %cst_19 = arith.constant dense<0.000000e+00> : vector<8x256xf32>
    %34 = tpu.matmul %30, %33, %cst_19 {dimension_numbers = #tpu.dot_dimension_numbers<[1], [0], [0], [1], [0, 0, 1, 1], [], []>} : vector<8x16xf32>, vector<16x256xf32>, vector<8x256xf32> -> vector<8x256xf32>
    %35 = arith.mulf %0, %34 : vector<8x256xf32>
    %c0_20 = arith.constant 0 : index
    %c0_21 = arith.constant 0 : index
    %36 = vector.load %arg5[%c0_20, %c0_21] : memref<16x256xf32, #tpu.memory_space<vmem>>, vector<16x256xf32>
    %cst_22 = arith.constant dense<0.000000e+00> : vector<8x256xf32>
    %37 = tpu.matmul %32, %36, %cst_22 {dimension_numbers = #tpu.dot_dimension_numbers<[1], [0], [0], [1], [0, 0, 1, 1], [], []>} : vector<8x16xf32>, vector<16x256xf32>, vector<8x256xf32> -> vector<8x256xf32>
    %38 = arith.mulf %35, %37 : vector<8x256xf32>
    %c0_23 = arith.constant 0 : index
    %c0_24 = arith.constant 0 : index
    %39 = vector.load %arg10[%c0_23, %c0_24] : memref<8x256xf32, #tpu.memory_space<vmem>>, vector<8x256xf32>
    tpu.vector_store %arg10[%c0_23, %c0_24], %38 {strides = array<i32>} : memref<8x256xf32, #tpu.memory_space<vmem>>, vector<8x256xf32>,
    return
  }
  func.func @transform_0(%arg0: i32) -> (i32, i32) {
    %c0_i32 = arith.constant 0 : i32
    %c0_i32_0 = arith.constant 0 : i32
    return %arg0, %c0_i32 : i32, i32
  }
  func.func @transform_1(%arg0: i32) -> (i32, i32) {
    %c0_i32 = arith.constant 0 : i32
    %c0_i32_0 = arith.constant 0 : i32
    %c0_i32_1 = arith.constant 0 : i32
    return %c0_i32, %c0_i32_0 : i32, i32
  }
  func.func @transform_2(%arg0: i32) -> (i32, i32) {
    %c0_i32 = arith.constant 0 : i32
    %c0_i32_0 = arith.constant 0 : i32
    %c0_i32_1 = arith.constant 0 : i32
    return %c0_i32, %c0_i32_0 : i32, i32
  }
  func.func @transform_3(%arg0: i32) -> (i32, i32) {
    %c0_i32 = arith.constant 0 : i32
    %c0_i32_0 = arith.constant 0 : i32
    %c0_i32_1 = arith.constant 0 : i32
    return %c0_i32, %c0_i32_0 : i32, i32
  }
  func.func @transform_4(%arg0: i32) -> (i32, i32) {
    %c0_i32 = arith.constant 0 : i32
    %c0_i32_0 = arith.constant 0 : i32
    %c0_i32_1 = arith.constant 0 : i32
    return %c0_i32, %c0_i32_0 : i32, i32
  }
  func.func @transform_5(%arg0: i32) -> (i32, i32) {
    %c0_i32 = arith.constant 0 : i32
    %c0_i32_0 = arith.constant 0 : i32
    %c0_i32_1 = arith.constant 0 : i32
    return %c0_i32, %c0_i32_0 : i32, i32
  }
  func.func @transform_6(%arg0: i32) -> (i32, i32) {
    %c0_i32 = arith.constant 0 : i32
    %c0_i32_0 = arith.constant 0 : i32
    %c0_i32_1 = arith.constant 0 : i32
    return %c0_i32, %c0_i32_0 : i32, i32
  }
  func.func @transform_7(%arg0: i32) -> (i32, i32) {
    %c0_i32 = arith.constant 0 : i32
    %c0_i32_0 = arith.constant 0 : i32
    %c0_i32_1 = arith.constant 0 : i32
    return %c0_i32, %c0_i32_0 : i32, i32
  }
  func.func @transform_8(%arg0: i32) -> (i32, i32) {
    %c0_i32 = arith.constant 0 : i32
    %c0_i32_0 = arith.constant 0 : i32
    %c0_i32_1 = arith.constant 0 : i32
    return %c0_i32, %c0_i32_0 : i32, i32
  }
  func.func @transform_9(%arg0: i32) -> (i32, i32) {
    %c0_i32 = arith.constant 0 : i32
    %c0_i32_0 = arith.constant 0 : i32
    return %arg0, %c0_i32 : i32, i32
  }
}

module attributes {stable_mosaic.version = 11 : i64} {
  func.func @coordatt_kernel(%arg0: i32, %arg1: memref<8x256xf32, #tpu.memory_space<vmem>>, %arg2: memref<256x32xf32, #tpu.memory_space<vmem>>, %arg3: memref<1x32xf32, #tpu.memory_space<vmem>>, %arg4: memref<16x256xf32, #tpu.memory_space<vmem>>, %arg5: memref<16x256xf32, #tpu.memory_space<vmem>>, %arg6: memref<8x8xf32, #tpu.memory_space<vmem>>, %arg7: memref<1x8xf32, #tpu.memory_space<vmem>>, %arg8: memref<8x16xf32, #tpu.memory_space<vmem>>, %arg9: memref<1x16xf32, #tpu.memory_space<vmem>>, %arg10: memref<8x256xf32, #tpu.memory_space<vmem>>) attributes {dimension_semantics = [#tpu.dimension_semantics<parallel>], iteration_bounds = array<i64: 2>, scalar_prefetch = 0 : i64, scratch_operands = 0 : i64, tpu.core_type = #tpu.core_type<tc>, window_params = [{transform_indices = @transform_0, window_bounds = array<i64: 8, 256>}, {pipeline_mode = #tpu.pipeline_mode<synchronous>, transform_indices = @transform_1, window_bounds = array<i64: 256, 32>}, {pipeline_mode = #tpu.pipeline_mode<synchronous>, transform_indices = @transform_2, window_bounds = array<i64: 1, 32>}, {pipeline_mode = #tpu.pipeline_mode<synchronous>, transform_indices = @transform_3, window_bounds = array<i64: 16, 256>}, {pipeline_mode = #tpu.pipeline_mode<synchronous>, transform_indices = @transform_4, window_bounds = array<i64: 16, 256>}, {pipeline_mode = #tpu.pipeline_mode<synchronous>, transform_indices = @transform_5, window_bounds = array<i64: 8, 8>}, {pipeline_mode = #tpu.pipeline_mode<synchronous>, transform_indices = @transform_6, window_bounds = array<i64: 1, 8>}, {pipeline_mode = #tpu.pipeline_mode<synchronous>, transform_indices = @transform_7, window_bounds = array<i64: 8, 16>}, {pipeline_mode = #tpu.pipeline_mode<synchronous>, transform_indices = @transform_8, window_bounds = array<i64: 1, 16>}, {transform_indices = @transform_9, window_bounds = array<i64: 8, 256>}]} {
    %c0 = arith.constant 0 : index
    %c0_0 = arith.constant 0 : index
    %0 = vector.load %arg1[%c0, %c0_0] : memref<8x256xf32, #tpu.memory_space<vmem>>, vector<8x256xf32>
    %c0_1 = arith.constant 0 : index
    %c0_2 = arith.constant 0 : index
    %1 = vector.load %arg2[%c0_1, %c0_2] : memref<256x32xf32, #tpu.memory_space<vmem>>, vector<256x32xf32>
    %cst = arith.constant dense<0.000000e+00> : vector<8x32xf32>
    %2 = tpu.matmul %0, %1, %cst {dimension_numbers = #tpu.dot_dimension_numbers<[1], [0], [0], [1], [0, 0, 1, 1], [], []>} : vector<8x256xf32>, vector<256x32xf32>, vector<8x32xf32> -> vector<8x32xf32>
    %c0_3 = arith.constant 0 : index
    %c0_4 = arith.constant 0 : index
    %3 = vector.load %arg3[%c0_3, %c0_4] : memref<1x32xf32, #tpu.memory_space<vmem>>, vector<1x32xf32>
    %4 = vector.broadcast %3 : vector<1x32xf32> to vector<8x32xf32>
    %5 = arith.mulf %2, %4 : vector<8x32xf32>
    %6 = vector.shape_cast %5 : vector<8x32xf32> to vector<1x8x32xf32>
    %c0_5 = arith.constant 0 : index
    %c0_6 = arith.constant 0 : index
    %7 = vector.load %arg6[%c0_5, %c0_6] : memref<8x8xf32, #tpu.memory_space<vmem>>, vector<8x8xf32>
    "tpu.trace_start"() <{level = 10 : i32, message = "bct,cm->btm"}> : () -> ()
    %cst_7 = arith.constant dense<0.000000e+00> : vector<1x32x8xf32>
    %8 = tpu.matmul %6, %7, %cst_7 {dimension_numbers = #tpu.dot_dimension_numbers<[1], [0], [0, 2], [1], [0, 0, 0, 2, 1, 1], [], []>} : vector<1x8x32xf32>, vector<8x8xf32>, vector<1x32x8xf32> -> vector<1x32x8xf32>
    "tpu.trace_stop"() : () -> ()
    %c0_8 = arith.constant 0 : index
    %c0_9 = arith.constant 0 : index
    %9 = vector.load %arg7[%c0_8, %c0_9] : memref<1x8xf32, #tpu.memory_space<vmem>>, vector<1x8xf32>
    %10 = vector.shape_cast %9 : vector<1x8xf32> to vector<1x1x8xf32>
    %11 = vector.broadcast %10 : vector<1x1x8xf32> to vector<1x32x8xf32>
    %12 = arith.addf %8, %11 : vector<1x32x8xf32>
    %cst_10 = arith.constant 0.000000e+00 : f32
    %13 = vector.broadcast %cst_10 : f32 to vector<1x32x8xf32>
    %14 = arith.maximumf %12, %13 : vector<1x32x8xf32>
    %15 = vector.shape_cast %14 : vector<1x32x8xf32> to vector<32x8xf32>
    %c0_11 = arith.constant 0 : index
    %c0_12 = arith.constant 0 : index
    %16 = vector.load %arg8[%c0_11, %c0_12] : memref<8x16xf32, #tpu.memory_space<vmem>>, vector<8x16xf32>
    %cst_13 = arith.constant dense<0.000000e+00> : vector<32x16xf32>
    %17 = tpu.matmul %15, %16, %cst_13 {dimension_numbers = #tpu.dot_dimension_numbers<[1], [0], [0], [1], [0, 0, 1, 1], [], []>} : vector<32x8xf32>, vector<8x16xf32>, vector<32x16xf32> -> vector<32x16xf32>
    %c0_14 = arith.constant 0 : index
    %c0_15 = arith.constant 0 : index
    %18 = vector.load %arg9[%c0_14, %c0_15] : memref<1x16xf32, #tpu.memory_space<vmem>>, vector<1x16xf32>
    %19 = vector.broadcast %18 : vector<1x16xf32> to vector<32x16xf32>
    %20 = arith.addf %17, %19 : vector<32x16xf32>
    %21 = arith.negf %20 : vector<32x16xf32>
    %22 = math.exp %21 : vector<32x16xf32>
    %cst_16 = arith.constant 1.000000e+00 : f32
    %23 = vector.broadcast %cst_16 : f32 to vector<32x16xf32>
    %24 = arith.addf %23, %22 : vector<32x16xf32>
    %25 = arith.divf %23, %24 : vector<32x16xf32>
    %26 = vector.shape_cast %25 : vector<32x16xf32> to vector<1x32x16xf32>
    %27 = vector.extract_strided_slice %26 {offsets = [0, 0, 0], sizes = [1, 16, 8], strides = [1, 1, 1]} : vector<1x32x16xf32> to vector<1x16x8xf32>
    %28 = vector.extract_strided_slice %26 {offsets = [0, 16, 8], sizes = [1, 16, 8], strides = [1, 1, 1]} : vector<1x32x16xf32> to vector<1x16x8xf32>
    %29 = tpu.transpose %27, [0, 2, 1] : vector<1x16x8xf32> -> vector<1x8x16xf32>
    %30 = vector.shape_cast %29 : vector<1x8x16xf32> to vector<8x16xf32>
    %31 = tpu.transpose %28, [0, 2, 1] : vector<1x16x8xf32> -> vector<1x8x16xf32>
    %32 = vector.shape_cast %31 : vector<1x8x16xf32> to vector<8x16xf32>
    %c0_17 = arith.constant 0 : index
    %c0_18 = arith.constant 0 : index
    %33 = vector.load %arg4[%c0_17, %c0_18] : memref<16x256xf32, #tpu.memory_space<vmem>>, vector<16x256xf32>
    %cst_19 = arith.constant dense<0.000000e+00> : vector<8x256xf32>
    %34 = tpu.matmul %30, %33, %cst_19 {dimension_numbers = #tpu.dot_dimension_numbers<[1], [0], [0], [1], [0, 0, 1, 1], [], []>} : vector<8x16xf32>, vector<16x256xf32>, vector<8x256xf32> -> vector<8x256xf32>
    %35 = arith.mulf %0, %34 : vector<8x256xf32>
    %c0_20 = arith.constant 0 : index
    %c0_21 = arith.constant 0 : index
    %36 = vector.load %arg5[%c0_20, %c0_21] : memref<16x256xf32, #tpu.memory_space<vmem>>, vector<16x256xf32>
    %cst_22 = arith.constant dense<0.000000e+00> : vector<8x256xf32>
    %37 = tpu.matmul %32, %36, %cst_22 {dimension_numbers = #tpu.dot_dimension_numbers<[1], [0], [0], [1], [0, 0, 1, 1], [], []>} : vector<8x16xf32>, vector<16x256xf32>, vector<8x256xf32> -> vector<8x256xf32>
    %38 = arith.mulf %35, %37 : vector<8x256xf32>
    %c0_23 = arith.constant 0 : index
    %c0_24 = arith.constant 0 : index
    %39 = vector.load %arg10[%c0_23, %c0_24] : memref<8x256xf32, #tpu.memory_space<vmem>>, vector<8x256xf32>
    tpu.vector_store %arg10[%c0_23, %c0_24], %38 {strides = array<i32>} : memref<8x256xf32, #tpu.memory_space<vmem>>, vector<8x256xf32>,
    return
  }
  func.func @transform_0(%arg0: i32) -> (i32, i32) {
    %c0_i32 = arith.constant 0 : i32
    %c0_i32_0 = arith.constant 0 : i32
    return %arg0, %c0_i32 : i32, i32
  }
  func.func @transform_1(%arg0: i32) -> (i32, i32) {
    %c0_i32 = arith.constant 0 : i32
    %c0_i32_0 = arith.constant 0 : i32
    %c0_i32_1 = arith.constant 0 : i32
    return %c0_i32, %c0_i32_0 : i32, i32
  }
  func.func @transform_2(%arg0: i32) -> (i32, i32) {
    %c0_i32 = arith.constant 0 : i32
    %c0_i32_0 = arith.constant 0 : i32
    %c0_i32_1 = arith.constant 0 : i32
    return %c0_i32, %c0_i32_0 : i32, i32
  }
  func.func @transform_3(%arg0: i32) -> (i32, i32) {
    %c0_i32 = arith.constant 0 : i32
    %c0_i32_0 = arith.constant 0 : i32
    %c0_i32_1 = arith.constant 0 : i32
    return %c0_i32, %c0_i32_0 : i32, i32
  }
  func.func @transform_4(%arg0: i32) -> (i32, i32) {
    %c0_i32 = arith.constant 0 : i32
    %c0_i32_0 = arith.constant 0 : i32
    %c0_i32_1 = arith.constant 0 : i32
    return %c0_i32, %c0_i32_0 : i32, i32
  }
  func.func @transform_5(%arg0: i32) -> (i32, i32) {
    %c0_i32 = arith.constant 0 : i32
    %c0_i32_0 = arith.constant 0 : i32
    %c0_i32_1 = arith.constant 0 : i32
    return %c0_i32, %c0_i32_0 : i32, i32
  }
  func.func @transform_6(%arg0: i32) -> (i32, i32) {
    %c0_i32 = arith.constant 0 : i32
    %c0_i32_0 = arith.constant 0 : i32
    %c0_i32_1 = arith.constant 0 : i32
    return %c0_i32, %c0_i32_0 : i32, i32
  }
  func.func @transform_7(%arg0: i32) -> (i32, i32) {
    %c0_i32 = arith.constant 0 : i32
    %c0_i32_0 = arith.constant 0 : i32
    %c0_i32_1 = arith.constant 0 : i32
    return %c0_i32, %c0_i32_0 : i32, i32
  }
  func.func @transform_8(%arg0: i32) -> (i32, i32) {
    %c0_i32 = arith.constant 0 : i32
    %c0_i32_0 = arith.constant 0 : i32
    %c0_i32_1 = arith.constant 0 : i32
    return %c0_i32, %c0_i32_0 : i32, i32
  }
  func.func @transform_9(%arg0: i32) -> (i32, i32) {
    %c0_i32 = arith.constant 0 : i32
    %c0_i32_0 = arith.constant 0 : i32
    return %arg0, %c0_i32 : i32, i32
  }
}

</mosaic_0001>

<llo_original>
// kernel: tpu_custom_call.1
$region0: #{tpu_custom_call.1}
  #allocation0 [shape = 'u32[]', space=smem, size = 0x4, offset = 0x4, fixed_abs, tag = 'smem constant byte address 0x4 - core index']
  #allocation1 [shape = 'u32[144,128]{1,0:T(1,128)}', space=vmem, size = 0x12000, scoped, tag = 'internal scratch']
  %s0 = inlined_call_operand.vmem [shape: f32[16,256], index: 0, kind: input, shape index: {}]
  %s1 = inlined_call_operand.vmem [shape: f32[256,32], index: 1, kind: input, shape index: {}]
  %s2 = inlined_call_operand.vmem [shape: f32[1,32], index: 2, kind: input, shape index: {}]
  %s3 = inlined_call_operand.vmem [shape: f32[16,256], index: 3, kind: input, shape index: {}]
  %s4 = inlined_call_operand.vmem [shape: f32[16,256], index: 4, kind: input, shape index: {}]
  %s5 = inlined_call_operand.vmem [shape: f32[8,8], index: 5, kind: input, shape index: {}]
  %s6 = inlined_call_operand.vmem [shape: f32[1,8], index: 6, kind: input, shape index: {}]
  %s7 = inlined_call_operand.vmem [shape: f32[8,16], index: 7, kind: input, shape index: {}]
  %s8 = inlined_call_operand.vmem [shape: f32[1,16], index: 8, kind: input, shape index: {}]
  %s9 = inlined_call_operand.hbm [shape: f32[16,256], index: 9, kind: output, shape index: {}]
  %s10 = sld [smem:[#allocation0]]
  $region69: #{tpu_custom_call.1} parent=0
    _
  %s12 = ssub.s32 1, %s10
  %s13 = scalar_select 0, %s12, %s10
  $region1: #{tpu_custom_call.1} parent=0
    #allocation2 [shape = 'u8[16384]{0}', space=vmem, size = 0x4000, scoped, tag = 'output window, operand 0']
    #allocation3 [shape = 's32[2]{0}', space=sflag, size = 0x8, scoped, tag = 'scoped memory for tpu_custom_call.1']
    %14 = vsyncpa [#allocation3], 0
    %s15 = scalar_lea.sflag [#allocation3], 1
    %16 = vsyncpa %s15, 0
    loop: start=0, step=1, limit=4
    $region2: #{tpu_custom_call.1} parent=1 // loop_pre_header
      _
    $region3: #{tpu_custom_call.1} parent=1 // loop_header
      %s18 = sphi 0, %s22
      %p19 = scmp.ge.s32.totalorder %s18, 4
      %s28 = sphi 0, %s30
      %s31 = sphi 0, %s28
      %s32 = sphi 0, %s31
      %s48 = sphi 0, %s32
      %s52 = sphi 0, %s52
      %s54 = sphi 0, %s52
      %s55 = sphi 0, %s54
      %s69 = sphi 0, %s55
      %s73 = sphi 0, %s73
      %s75 = sphi 0, %s73
      %s76 = sphi 0, %s75
      %s90 = sphi 0, %s76
      %s94 = sphi 0, %s94
      %s96 = sphi 0, %s94
      %s97 = sphi 0, %s96
      %s111 = sphi 0, %s97
      %s115 = sphi 0, %s115
      %s117 = sphi 0, %s115
      %s118 = sphi 0, %s117
      %s132 = sphi 0, %s118
      %s136 = sphi 0, %s136
      %s138 = sphi 0, %s136
      %s139 = sphi 0, %s138
      %s153 = sphi 0, %s139
      %s157 = sphi 0, %s157
      %s159 = sphi 0, %s157
      %s160 = sphi 0, %s159
      %s174 = sphi 0, %s160
      %s178 = sphi 0, %s178
      %s180 = sphi 0, %s178
      %s181 = sphi 0, %s180
      %s195 = sphi 0, %s181
      %s199 = sphi 0, %s199
      %s201 = sphi 0, %s199
      %s202 = sphi 0, %s201
      %s216 = sphi 0, %s202
      %s222 = sphi 0, %s224
      %s225 = sphi 0, %s222
      %s226 = sphi 0, %s225
      %s242 = sphi 0, %s226
    $region4: #{tpu_custom_call.1} parent=1 // loop_header_branch
      %21 = sbr.rel (%p19) target = $region8
    $region5: #{tpu_custom_call.1} parent=1 // loop_body
      %s23 = ssub.s32 %s18, 1
      %s24 = ssub.s32 %s18, 2
      %s25 = sadd.s32 %s18, 1
      %s26 = ssub.s32 %s18, %s25
      %p27 = scmp.eq.s32.totalorder %s26, 0
      %s29 = sadd.s32 %s28, 1
      %s30 = scalar_select %p27, %s28, %s29
      %p33 = pneg %p27
      %p34 = scmp.eq.s32.totalorder %s18, 1
      %p35 = por %p33, %p34
      %p36 = scmp.ne.s32.totalorder %s28, %s31
      %p37 = scmp.eq.s32.totalorder %s18, 0
      %p38 = por %p36, %p37
      %p39 = scmp.ne.s32.totalorder %s28, %s31
      %p40 = scmp.eq.s32.totalorder %s23, 1
      %p41 = por %p39, %p40
      %p42 = scmp.ne.s32.totalorder %s31, %s32
      %p43 = scmp.eq.s32.totalorder %s23, 0
      %p44 = por %p42, %p43
      %p45 = scmp.ne.s32.totalorder %s31, %s32
      %p46 = scmp.eq.s32.totalorder %s24, 1
      %p47 = por %p45, %p46
      %p49 = scmp.ne.s32.totalorder %s32, %s48
      %p50 = scmp.eq.s32.totalorder %s24, 0
      %p51 = por %p49, %p50
      %s53 = sadd.s32 %s52, 1
      %p56 = scmp.eq.s32.totalorder %s18, 1
      %p57 = scmp.ne.s32.totalorder %s52, %s54
      %p58 = scmp.eq.s32.totalorder %s18, 0
      %p59 = por %p57, %p58
      %p60 = scmp.ne.s32.totalorder %s52, %s54
      %p61 = scmp.eq.s32.totalorder %s23, 1
      %p62 = por %p60, %p61
      %p63 = scmp.ne.s32.totalorder %s54, %s55
      %p64 = scmp.eq.s32.totalorder %s23, 0
      %p65 = por %p63, %p64
      %p66 = scmp.ne.s32.totalorder %s54, %s55
      %p67 = scmp.eq.s32.totalorder %s24, 1
      %p68 = por %p66, %p67
      %p70 = scmp.ne.s32.totalorder %s55, %s69
      %p71 = scmp.eq.s32.totalorder %s24, 0
      %p72 = por %p70, %p71
      %s74 = sadd.s32 %s73, 1
      %p77 = scmp.eq.s32.totalorder %s18, 1
      %p78 = scmp.ne.s32.totalorder %s73, %s75
      %p79 = scmp.eq.s32.totalorder %s18, 0
      %p80 = por %p78, %p79
      %p81 = scmp.ne.s32.totalorder %s73, %s75
      %p82 = scmp.eq.s32.totalorder %s23, 1
      %p83 = por %p81, %p82
      %p84 = scmp.ne.s32.totalorder %s75, %s76
      %p85 = scmp.eq.s32.totalorder %s23, 0
      %p86 = por %p84, %p85
      %p87 = scmp.ne.s32.totalorder %s75, %s76
      %p88 = scmp.eq.s32.totalorder %s24, 1
      %p89 = por %p87, %p88
      %p91 = scmp.ne.s32.totalorder %s76, %s90
      %p92 = scmp.eq.s32.totalorder %s24, 0
      %p93 = por %p91, %p92
      %s95 = sadd.s32 %s94, 1
      %p98 = scmp.eq.s32.totalorder %s18, 1
      %p99 = scmp.ne.s32.totalorder %s94, %s96
      %p100 = scmp.eq.s32.totalorder %s18, 0
      %p101 = por %p99, %p100
      %p102 = scmp.ne.s32.totalorder %s94, %s96
      %p103 = scmp.eq.s32.totalorder %s23, 1
      %p104 = por %p102, %p103
      %p105 = scmp.ne.s32.totalorder %s96, %s97
      %p106 = scmp.eq.s32.totalorder %s23, 0
      %p107 = por %p105, %p106
      %p108 = scmp.ne.s32.totalorder %s96, %s97
      %p109 = scmp.eq.s32.totalorder %s24, 1
      %p110 = por %p108, %p109
      %p112 = scmp.ne.s32.totalorder %s97, %s111
      %p113 = scmp.eq.s32.totalorder %s24, 0
      %p114 = por %p112, %p113
      %s116 = sadd.s32 %s115, 1
      %p119 = scmp.eq.s32.totalorder %s18, 1
      %p120 = scmp.ne.s32.totalorder %s115, %s117
      %p121 = scmp.eq.s32.totalorder %s18, 0
      %p122 = por %p120, %p121
      %p123 = scmp.ne.s32.totalorder %s115, %s117
      %p124 = scmp.eq.s32.totalorder %s23, 1
      %p125 = por %p123, %p124
      %p126 = scmp.ne.s32.totalorder %s117, %s118
      %p127 = scmp.eq.s32.totalorder %s23, 0
      %p128 = por %p126, %p127
      %p129 = scmp.ne.s32.totalorder %s117, %s118
      %p130 = scmp.eq.s32.totalorder %s24, 1
      %p131 = por %p129, %p130
      %p133 = scmp.ne.s32.totalorder %s118, %s132
      %p134 = scmp.eq.s32.totalorder %s24, 0
      %p135 = por %p133, %p134
      %s137 = sadd.s32 %s136, 1
      %p140 = scmp.eq.s32.totalorder %s18, 1
      %p141 = scmp.ne.s32.totalorder %s136, %s138
      %p142 = scmp.eq.s32.totalorder %s18, 0
      %p143 = por %p141, %p142
      %p144 = scmp.ne.s32.totalorder %s136, %s138
      %p145 = scmp.eq.s32.totalorder %s23, 1
      %p146 = por %p144, %p145
      %p147 = scmp.ne.s32.totalorder %s138, %s139
      %p148 = scmp.eq.s32.totalorder %s23, 0
      %p149 = por %p147, %p148
      %p150 = scmp.ne.s32.totalorder %s138, %s139
      %p151 = scmp.eq.s32.totalorder %s24, 1
      %p152 = por %p150, %p151
      %p154 = scmp.ne.s32.totalorder %s139, %s153
      %p155 = scmp.eq.s32.totalorder %s24, 0
      %p156 = por %p154, %p155
      %s158 = sadd.s32 %s157, 1
      %p161 = scmp.eq.s32.totalorder %s18, 1
      %p162 = scmp.ne.s32.totalorder %s157, %s159
      %p163 = scmp.eq.s32.totalorder %s18, 0
      %p164 = por %p162, %p163
      %p165 = scmp.ne.s32.totalorder %s157, %s159
      %p166 = scmp.eq.s32.totalorder %s23, 1
      %p167 = por %p165, %p166
      %p168 = scmp.ne.s32.totalorder %s159, %s160
      %p169 = scmp.eq.s32.totalorder %s23, 0
      %p170 = por %p168, %p169
      %p171 = scmp.ne.s32.totalorder %s159, %s160
      %p172 = scmp.eq.s32.totalorder %s24, 1
      %p173 = por %p171, %p172
      %p175 = scmp.ne.s32.totalorder %s160, %s174
      %p176 = scmp.eq.s32.totalorder %s24, 0
      %p177 = por %p175, %p176
      %s179 = sadd.s32 %s178, 1
      %p182 = scmp.eq.s32.totalorder %s18, 1
      %p183 = scmp.ne.s32.totalorder %s178, %s180
      %p184 = scmp.eq.s32.totalorder %s18, 0
      %p185 = por %p183, %p184
      %p186 = scmp.ne.s32.totalorder %s178, %s180
      %p187 = scmp.eq.s32.totalorder %s23, 1
      %p188 = por %p186, %p187
      %p189 = scmp.ne.s32.totalorder %s180, %s181
      %p190 = scmp.eq.s32.totalorder %s23, 0
      %p191 = por %p189, %p190
      %p192 = scmp.ne.s32.totalorder %s180, %s181
      %p193 = scmp.eq.s32.totalorder %s24, 1
      %p194 = por %p192, %p193
      %p196 = scmp.ne.s32.totalorder %s181, %s195
      %p197 = scmp.eq.s32.totalorder %s24, 0
      %p198 = por %p196, %p197
      %s200 = sadd.s32 %s199, 1
      %p203 = scmp.eq.s32.totalorder %s18, 1
      %p204 = scmp.ne.s32.totalorder %s199, %s201
      %p205 = scmp.eq.s32.totalorder %s18, 0
      %p206 = por %p204, %p205
      %p207 = scmp.ne.s32.totalorder %s199, %s201
      %p208 = scmp.eq.s32.totalorder %s23, 1
      %p209 = por %p207, %p208
      %p210 = scmp.ne.s32.totalorder %s201, %s202
      %p211 = scmp.eq.s32.totalorder %s23, 0
      %p212 = por %p210, %p211
      %p213 = scmp.ne.s32.totalorder %s201, %s202
      %p214 = scmp.eq.s32.totalorder %s24, 1
      %p215 = por %p213, %p214
      %p217 = scmp.ne.s32.totalorder %s202, %s216
      %p218 = scmp.eq.s32.totalorder %s24, 0
      %p219 = por %p217, %p218
      %s220 = ssub.s32 %s18, %s25
      %p221 = scmp.eq.s32.totalorder %s220, 0
      %s223 = sadd.s32 %s222, 1
      %s224 = scalar_select %p221, %s222, %s223
      %p227 = pneg %p221
      %p228 = scmp.eq.s32.totalorder %s18, 1
      %p229 = por %p227, %p228
      %p230 = scmp.ne.s32.totalorder %s222, %s225
      %p231 = scmp.eq.s32.totalorder %s18, 0
      %p232 = por %p230, %p231
      %p233 = scmp.ne.s32.totalorder %s222, %s225
      %p234 = scmp.eq.s32.totalorder %s23, 1
      %p235 = por %p233, %p234
      %p236 = scmp.ne.s32.totalorder %s225, %s226
      %p237 = scmp.eq.s32.totalorder %s23, 0
      %p238 = por %p236, %p237
      %p239 = scmp.ne.s32.totalorder %s225, %s226
      %p240 = scmp.eq.s32.totalorder %s24, 1
      %p241 = por %p239, %p240
      %p243 = scmp.ne.s32.totalorder %s226, %s242
      %p244 = scmp.eq.s32.totalorder %s24, 0
      %p245 = por %p243, %p244
      %p246 = scmp.le.s32.totalorder 1, %s18
      %p247 = scmp.lt.s32.totalorder %s18, 3
      %p248 = pnand %p246, %p247
      %p249 = pneg %p248
      // Predicated region
      $region9: #{tpu_custom_call.1} parent=5 // pred_check
        _
      $region10: #{tpu_custom_call.1} parent=5 // pred_check_branch
        %251 = sbr.rel (%p248) target = $region12
      $region11: #{tpu_custom_call.1} parent=5 // pred_region
        %s252 = ssub.s32 %s18, 1
        // Predicated region
        $region13: #{tpu_custom_call.1} parent=11 // pred_check
          %p253 = pneg %p65
        $region14: #{tpu_custom_call.1} parent=11 // pred_check_branch
          %255 = sbr.rel (%p253) target = $region16
        $region15: #{tpu_custom_call.1} parent=11 // pred_region
          _
        $region16: #{tpu_custom_call.1} parent=11 // pred_fallthru
          _
        // Predicated region
        $region17: #{tpu_custom_call.1} parent=11 // pred_check
          %p256 = pneg %p86
        $region18: #{tpu_custom_call.1} parent=11 // pred_check_branch
          %258 = sbr.rel (%p256) target = $region20
        $region19: #{tpu_custom_call.1} parent=11 // pred_region
          _
        $region20: #{tpu_custom_call.1} parent=11 // pred_fallthru
          _
        // Predicated region
        $region21: #{tpu_custom_call.1} parent=11 // pred_check
          %p259 = pneg %p107
        $region22: #{tpu_custom_call.1} parent=11 // pred_check_branch
          %261 = sbr.rel (%p259) target = $region24
        $region23: #{tpu_custom_call.1} parent=11 // pred_region
          _
        $region24: #{tpu_custom_call.1} parent=11 // pred_fallthru
          _
        // Predicated region
        $region25: #{tpu_custom_call.1} parent=11 // pred_check
          %p262 = pneg %p128
        $region26: #{tpu_custom_call.1} parent=11 // pred_check_branch
          %264 = sbr.rel (%p262) target = $region28
        $region27: #{tpu_custom_call.1} parent=11 // pred_region
          _
        $region28: #{tpu_custom_call.1} parent=11 // pred_fallthru
          _
        // Predicated region
        $region29: #{tpu_custom_call.1} parent=11 // pred_check
          %p265 = pneg %p149
        $region30: #{tpu_custom_call.1} parent=11 // pred_check_branch
          %267 = sbr.rel (%p265) target = $region32
        $region31: #{tpu_custom_call.1} parent=11 // pred_region
          _
        $region32: #{tpu_custom_call.1} parent=11 // pred_fallthru
          _
        // Predicated region
        $region33: #{tpu_custom_call.1} parent=11 // pred_check
          %p268 = pneg %p170
        $region34: #{tpu_custom_call.1} parent=11 // pred_check_branch
          %270 = sbr.rel (%p268) target = $region36
        $region35: #{tpu_custom_call.1} parent=11 // pred_region
          _
        $region36: #{tpu_custom_call.1} parent=11 // pred_fallthru
          _
        // Predicated region
        $region37: #{tpu_custom_call.1} parent=11 // pred_check
          %p271 = pneg %p191
        $region38: #{tpu_custom_call.1} parent=11 // pred_check_branch
          %273 = sbr.rel (%p271) target = $region40
        $region39: #{tpu_custom_call.1} parent=11 // pred_region
          _
        $region40: #{tpu_custom_call.1} parent=11 // pred_fallthru
          _
        // Predicated region
        $region41: #{tpu_custom_call.1} parent=11 // pred_check
          %p274 = pneg %p212
        $region42: #{tpu_custom_call.1} parent=11 // pred_check_branch
          %276 = sbr.rel (%p274) target = $region44
        $region43: #{tpu_custom_call.1} parent=11 // pred_region
          _
        $region44: #{tpu_custom_call.1} parent=11 // pred_fallthru
          _
      $region12: #{tpu_custom_call.1} parent=5 // pred_fallthru
        _
      %p277 = scmp.lt.s32.totalorder %s18, 2
      // Predicated region
      $region45: #{tpu_custom_call.1} parent=5 // pred_check
        %p278 = pneg %p277
      $region46: #{tpu_custom_call.1} parent=5 // pred_check_branch
        %280 = sbr.rel (%p278) target = $region48
      $region47: #{tpu_custom_call.1} parent=5 // pred_region
        // Predicated region
        $region49: #{tpu_custom_call.1} parent=47 // pred_check
          %p281 = pneg %p38
        $region50: #{tpu_custom_call.1} parent=47 // pred_check_branch
          %283 = sbr.rel (%p281) target = $region52
        $region51: #{tpu_custom_call.1} parent=47 // pred_region
          %p284 = scmp.lt.s32.totalorder %s18, 1
          %s285 = scalar_select %p284, %s18, 1
          %s286 = smul.addr %s285, 2
          %s287 = smul.addr %s286, 8
          %s288 = scalar_lea.vmem %s0, %s287
        $region52: #{tpu_custom_call.1} parent=47 // pred_fallthru
          _
      $region48: #{tpu_custom_call.1} parent=5 // pred_fallthru
        _
      %p289 = scmp.le.s32.totalorder 1, %s18
      %p290 = scmp.lt.s32.totalorder %s18, 3
      %p291 = pnand %p289, %p290
      %p292 = pneg %p291
      // Predicated region
      $region53: #{tpu_custom_call.1} parent=5 // pred_check
        _
      $region54: #{tpu_custom_call.1} parent=5 // pred_check_branch
        %294 = sbr.rel (%p291) target = $region56
      $region55: #{tpu_custom_call.1} parent=5 // pred_region
        %s295 = ssub.s32 %s18, 1
        %p296 = scmp.lt.s32.totalorder %s23, 1
        %s297 = scalar_select %p296, %s23, 1
        %s298 = smul.addr %s297, 2
        %s299 = smul.addr %s298, 8
        %s300 = scalar_lea.vmem %s0, %s299
        %p301 = pneg %p44
        %p302 = pneg %p41
        %p303 = pneg %p65
        %p304 = pneg %p62
        %p305 = pneg %p86
        %p306 = pneg %p83
        %p307 = pneg %p107
        %p308 = pneg %p104
        %p309 = pneg %p128
        %p310 = pneg %p125
        %p311 = pneg %p149
        %p312 = pneg %p146
        %p313 = pneg %p170
        %p314 = pneg %p167
        %p315 = pneg %p191
        %p316 = pneg %p188
        %p317 = pneg %p212
        %p318 = pneg %p209
        %p319 = pneg %p238
        %p320 = pneg %p235
        %s321 = sand.u32 %s225, 1
        %s322 = scalar_lea.sflag [#allocation3], %s321
        %s323 = sand.u32 %s225, 1
        %s324 = smul.addr %s323, 16
        %s325 = scalar_lea.vmem [#allocation2], %s324
        %p326 = scmp.lt.s32.totalorder %s23, 1
        %s327 = scalar_select %p326, %s23, 1
        %s328 = smul.addr %s327, 2
        %s329 = smul.addr %s328, 8
        %s330 = scalar_lea.vmem %s0, %s329
        %v331 = vld [vmem:[%s330] sm:$0xff]
        %v332 = vld [vmem:[%s330 + $0x8] sm:$0xff]
        %v333 = vld [vmem:[%s1] sm:$0xff]
        %v334 = vld [vmem:[%s1 + $0x8] sm:$0xff]
        %v335 = vld [vmem:[%s1 + $0x10] sm:$0xff]
        %v336 = vld [vmem:[%s1 + $0x18] sm:$0xff]
        %v337 = vld [vmem:[%s1 + $0x20] sm:$0xff]
        %v338 = vld [vmem:[%s1 + $0x28] sm:$0xff]
        %v339 = vld [vmem:[%s1 + $0x30] sm:$0xff]
        %v340 = vld [vmem:[%s1 + $0x38] sm:$0xff]
        %v341 = vld [vmem:[%s1 + $0x40] sm:$0xff]
        %v342 = vld [vmem:[%s1 + $0x48] sm:$0xff]
        %v343 = vld [vmem:[%s1 + $0x50] sm:$0xff]
        %v344 = vld [vmem:[%s1 + $0x58] sm:$0xff]
        %v345 = vld [vmem:[%s1 + $0x60] sm:$0xff]
        %v346 = vld [vmem:[%s1 + $0x68] sm:$0xff]
        %v347 = vld [vmem:[%s1 + $0x70] sm:$0xff]
        %v348 = vld [vmem:[%s1 + $0x78] sm:$0xff]
        %v349 = vld [vmem:[%s1 + $0x80] sm:$0xff]
        %v350 = vld [vmem:[%s1 + $0x88] sm:$0xff]
        %v351 = vld [vmem:[%s1 + $0x90] sm:$0xff]
        %v352 = vld [vmem:[%s1 + $0x98] sm:$0xff]
        %v353 = vld [vmem:[%s1 + $0xa0] sm:$0xff]
        %v354 = vld [vmem:[%s1 + $0xa8] sm:$0xff]
        %v355 = vld [vmem:[%s1 + $0xb0] sm:$0xff]
        %v356 = vld [vmem:[%s1 + $0xb8] sm:$0xff]
        %v357 = vld [vmem:[%s1 + $0xc0] sm:$0xff]
        %v358 = vld [vmem:[%s1 + $0xc8] sm:$0xff]
        %v359 = vld [vmem:[%s1 + $0xd0] sm:$0xff]
        %v360 = vld [vmem:[%s1 + $0xd8] sm:$0xff]
        %v361 = vld [vmem:[%s1 + $0xe0] sm:$0xff]
        %v362 = vld [vmem:[%s1 + $0xe8] sm:$0xff]
        %v363 = vld [vmem:[%s1 + $0xf0] sm:$0xff]
        %v364 = vld [vmem:[%s1 + $0xf8] sm:$0xff]
        %365 = vmatprep.subr.mxu0 0.0
        %366 = vmatpush1.msra.mxu0 %v333
        %367 = vmatprep.subr.mxu0 0.0
        %368 = vmatpush1.msra.mxu0 %v334
        %369 = vmatprep.subr.mxu0 0.0
        %370 = vmatpush1.msra.mxu0 %v335
        %371 = vmatprep.subr.mxu0 0.0
        %372 = vmatpush1.msra.mxu0 %v336
        %373 = vmatprep.subr.mxu0 0.0
        %374 = vmatpush1.msra.mxu0 %v337
        %375 = vmatprep.subr.mxu0 0.0
        %376 = vmatpush1.msra.mxu0 %v338
        %377 = vmatprep.subr.mxu0 0.0
        %378 = vmatpush1.msra.mxu0 %v339
        %379 = vmatprep.subr.mxu0 0.0
        %380 = vmatpush1.msra.mxu0 %v340
        %381 = vmatprep.subr.mxu0 0.0
        %382 = vmatpush1.msra.mxu0 %v341
        %383 = vmatprep.subr.mxu0 0.0
        %384 = vmatpush1.msra.mxu0 %v342
        %385 = vmatprep.subr.mxu0 0.0
        %386 = vmatpush1.msra.mxu0 %v343
        %387 = vmatprep.subr.mxu0 0.0
        %388 = vmatpush1.msra.mxu0 %v344
        %389 = vmatprep.subr.mxu0 0.0
        %390 = vmatpush1.msra.mxu0 %v345
        %391 = vmatprep.subr.mxu0 0.0
        %392 = vmatpush1.msra.mxu0 %v346
        %393 = vmatprep.subr.mxu0 0.0
        %394 = vmatpush1.msra.mxu0 %v347
        %395 = vmatprep.subr.mxu0 0.0
        %396 = vmatpush1.msra.mxu0 %v348
        %397 = vmatprep.subr.mxu0 0.0
        %398 = vmatpush1.msra.mxu0 %v349
        %399 = vmatprep.subr.mxu0 0.0
        %400 = vmatpush1.msra.mxu0 %v350
        %401 = vmatprep.subr.mxu0 0.0
        %402 = vmatpush1.msra.mxu0 %v351
        %403 = vmatprep.subr.mxu0 0.0
        %404 = vmatpush1.msra.mxu0 %v352
        %405 = vmatprep.subr.mxu0 0.0
        %406 = vmatpush1.msra.mxu0 %v353
        %407 = vmatprep.subr.mxu0 0.0
        %408 = vmatpush1.msra.mxu0 %v354
        %409 = vmatprep.subr.mxu0 0.0
        %410 = vmatpush1.msra.mxu0 %v355
        %411 = vmatprep.subr.mxu0 0.0
        %412 = vmatpush1.msra.mxu0 %v356
        %413 = vmatprep.subr.mxu0 0.0
        %414 = vmatpush1.msra.mxu0 %v357
        %415 = vmatprep.subr.mxu0 0.0
        %416 = vmatpush1.msra.mxu0 %v358
        %417 = vmatprep.subr.mxu0 0.0
        %418 = vmatpush1.msra.mxu0 %v359
        %419 = vmatprep.subr.mxu0 0.0
        %420 = vmatpush1.msra.mxu0 %v360
        %421 = vmatprep.subr.mxu0 0.0
        %422 = vmatpush1.msra.mxu0 %v361
        %423 = vmatprep.subr.mxu0 0.0
        %424 = vmatpush1.msra.mxu0 %v362
        %425 = vmatprep.subr.mxu0 0.0
        %426 = vmatpush1.msra.mxu0 %v363
        %427 = vmatprep.subr.mxu0 0.0
        %428 = vmatpush1.msra.mxu0 %v364
        %429 = vmatprep.mubr.f32.mxu0 %v332
        %430 = vmatmul.mubr.f32.gmra.mrb[0].mxu0 %v331
        %v431 = vpop.f32.mrb[0].mxu0
        %v432 = vadd.f32 0.0, %v431
        %v433 = vpop.f32.mrb[0].mxu0
        %434 = vdwg.mxu0
        %v435 = vld [vmem:[%s2] sm:$0x1]
        %v437 = vlaneseq
        %v438 = vshrl.u32 %v437, 7
        %v439 = vsub.s32 0, %v438
        %v440 = vrot.slane %v435, %v439
        %v442 = vmul.f32 %v432, %v440
        %v443 = vld [vmem:[%s5] sm:$0xff]
        %v444 = vld [vmem:[%s6] sm:$0x1]
        %v446 = vlaneseq
        %v447 = vshrl.u32 %v446, 7
        %v448 = vsub.s32 0, %v447
        %v449 = vrot.slane %v444, %v448
        %451 = vxpose.xlu0.b32.start [1/16] %v442, 128
        %452 = vxpose.xlu0.b32.cont [2/16] 0.0, 128
        %453 = vxpose.xlu0.b32.cont [3/16] 0.0, 128
        %454 = vxpose.xlu0.b32.cont [4/16] 0.0, 128
        %455 = vxpose.xlu0.b32.cont [5/16] 0.0, 128
        %456 = vxpose.xlu0.b32.cont [6/16] 0.0, 128
        %457 = vxpose.xlu0.b32.cont [7/16] 0.0, 128
        %458 = vxpose.xlu0.b32.cont [8/16] 0.0, 128
        %459 = vxpose.xlu0.b32.cont [9/16] 0.0, 128
        %460 = vxpose.xlu0.b32.cont [10/16] 0.0, 128
        %461 = vxpose.xlu0.b32.cont [11/16] 0.0, 128
        %462 = vxpose.xlu0.b32.cont [12/16] 0.0, 128
        %463 = vxpose.xlu0.b32.cont [13/16] 0.0, 128
        %464 = vxpose.xlu0.b32.cont [14/16] 0.0, 128
        %465 = vxpose.xlu0.b32.cont [15/16] 0.0, 128
        %466 = vxpose.xlu0.b32.end [16/16] 0.0, 128
        %v467 = vpop.trf.xlu0
        %v468 = vpop.trf.xlu0
        %v469 = vpop.trf.xlu0
        %v470 = vpop.trf.xlu0
        %v471 = vpop.trf.xlu0
        %v472 = vpop.trf.xlu0
        %v473 = vpop.trf.xlu0
        %v474 = vpop.trf.xlu0
        %v475 = vpop.trf.xlu0
        %v476 = vpop.trf.xlu0
        %v477 = vpop.trf.xlu0
        %v478 = vpop.trf.xlu0
        %v479 = vpop.trf.xlu0
        %v480 = vpop.trf.xlu0
        %v481 = vpop.trf.xlu0
        %v482 = vpop.trf.xlu0
        %vm483 = vcmask 64512
        %v485 = vsel %vm483, %v467, 0
        %v488 = vsel %vm483, %v468, 0
        %v491 = vsel %vm483, %v469, 0
        %v494 = vsel %vm483, %v470, 0
        %496 = vmatprep.subr.mxu0 0.0
        %497 = vmatpush1.msra.mxu0 %v443
        %498 = vmatprep.subr.mxu0 0.0
        %499 = vmatpush1.msra.mxu0 0.0
        %500 = vmatprep.subr.mxu0 0.0
        %501 = vmatpush1.msra.mxu0 0.0
        %502 = vmatprep.subr.mxu0 0.0
        %503 = vmatpush1.msra.mxu0 0.0
        %504 = vmatprep.subr.mxu0 0.0
        %505 = vmatpush1.msra.mxu0 0.0
        %506 = vmatprep.subr.mxu0 0.0
        %507 = vmatpush1.msra.mxu0 0.0
        %508 = vmatprep.subr.mxu0 0.0
        %509 = vmatpush1.msra.mxu0 0.0
        %510 = vmatprep.subr.mxu0 0.0
        %511 = vmatpush1.msra.mxu0 0.0
        %512 = vmatprep.subr.mxu0 0.0
        %513 = vmatpush1.msra.mxu0 0.0
        %514 = vmatprep.subr.mxu0 0.0
        %515 = vmatpush1.msra.mxu0 0.0
        %516 = vmatprep.subr.mxu0 0.0
        %517 = vmatpush1.msra.mxu0 0.0
        %518 = vmatprep.subr.mxu0 0.0
        %519 = vmatpush1.msra.mxu0 0.0
        %520 = vmatprep.subr.mxu0 0.0
        %521 = vmatpush1.msra.mxu0 0.0
        %522 = vmatprep.subr.mxu0 0.0
        %523 = vmatpush1.msra.mxu0 0.0
        %524 = vmatprep.subr.mxu0 0.0
        %525 = vmatpush1.msra.mxu0 0.0
        %526 = vmatprep.subr.mxu0 0.0
        %527 = vmatpush1.msra.mxu0 0.0
        %528 = vmatprep.subr.mxu0 0.0
        %529 = vmatpush1.msra.mxu0 0.0
        %530 = vmatprep.subr.mxu0 0.0
        %531 = vmatpush1.msra.mxu0 0.0
        %532 = vmatprep.subr.mxu0 0.0
        %533 = vmatpush1.msra.mxu0 0.0
        %534 = vmatprep.subr.mxu0 0.0
        %535 = vmatpush1.msra.mxu0 0.0
        %536 = vmatprep.subr.mxu0 0.0
        %537 = vmatpush1.msra.mxu0 0.0
        %538 = vmatprep.subr.mxu0 0.0
        %539 = vmatpush1.msra.mxu0 0.0
        %540 = vmatprep.subr.mxu0 0.0
        %541 = vmatpush1.msra.mxu0 0.0
        %542 = vmatprep.subr.mxu0 0.0
        %543 = vmatpush1.msra.mxu0 0.0
        %544 = vmatprep.subr.mxu0 0.0
        %545 = vmatpush1.msra.mxu0 0.0
        %546 = vmatprep.subr.mxu0 0.0
        %547 = vmatpush1.msra.mxu0 0.0
        %548 = vmatprep.subr.mxu0 0.0
        %549 = vmatpush1.msra.mxu0 0.0
        %550 = vmatprep.subr.mxu0 0.0
        %551 = vmatpush1.msra.mxu0 0.0
        %552 = vmatprep.subr.mxu0 0.0
        %553 = vmatpush1.msra.mxu0 0.0
        %554 = vmatprep.subr.mxu0 0.0
        %555 = vmatpush1.msra.mxu0 0.0
        %556 = vmatprep.subr.mxu0 0.0
        %557 = vmatpush1.msra.mxu0 0.0
        %558 = vmatprep.subr.mxu0 0.0
        %559 = vmatpush1.msra.mxu0 0.0
        %560 = vmatprep.mubr.f32.mxu0 0.0
        %561 = vmatmul.mubr.f32.gmra.mrb[0].mxu0 %v485
        %v562 = vpop.f32.mrb[0].mxu0
        %v563 = vadd.f32 %v449, %v562
        %v564 = vpop.f32.mrb[0].mxu0
        %565 = vmatprep.mubr.f32.mxu0 0.0
        %566 = vmatmul.mubr.f32.gmra.mrb[0].mxu0 %v488
        %v567 = vpop.f32.mrb[0].mxu0
        %v568 = vadd.f32 %v449, %v567
        %v569 = vpop.f32.mrb[0].mxu0
        %570 = vmatprep.mubr.f32.mxu0 0.0
        %571 = vmatmul.mubr.f32.gmra.mrb[0].mxu0 %v491
        %v572 = vpop.f32.mrb[0].mxu0
        %v573 = vadd.f32 %v449, %v572
        %v574 = vpop.f32.mrb[0].mxu0
        %575 = vmatprep.mubr.f32.mxu0 0.0
        %576 = vmatmul.mubr.f32.gmra.mrb[0].mxu0 %v494
        %v577 = vpop.f32.mrb[0].mxu0
        %v578 = vadd.f32 %v449, %v577
        %v579 = vpop.f32.mrb[0].mxu0
        %580 = vdwg.mxu0
        %v581 = vmax.f32 %v563, 0.0
        %v582 = vmax.f32 %v568, 0.0
        %v583 = vmax.f32 %v573, 0.0
        %v584 = vmax.f32 %v578, 0.0
        %v585 = vld [vmem:[%s7] sm:$0xff]
        %v586 = vld [vmem:[%s8] sm:$0x1]
        %v588 = vlaneseq
        %v589 = vshrl.u32 %v588, 7
        %v590 = vsub.s32 0, %v589
        %v591 = vrot.slane %v586, %v590
        %v594 = vsel %vm483, %v581, 0
        %v597 = vsel %vm483, %v582, 0
        %v600 = vsel %vm483, %v583, 0
        %v603 = vsel %vm483, %v584, 0
        %605 = vmatprep.subr.mxu0 0.0
        %606 = vmatpush1.msra.mxu0 %v585
        %607 = vmatprep.subr.mxu0 0.0
        %608 = vmatpush1.msra.mxu0 0.0
        %609 = vmatprep.subr.mxu0 0.0
        %610 = vmatpush1.msra.mxu0 0.0
        %611 = vmatprep.subr.mxu0 0.0
        %612 = vmatpush1.msra.mxu0 0.0
        %613 = vmatprep.subr.mxu0 0.0
        %614 = vmatpush1.msra.mxu0 0.0
        %615 = vmatprep.subr.mxu0 0.0
        %616 = vmatpush1.msra.mxu0 0.0
        %617 = vmatprep.subr.mxu0 0.0
        %618 = vmatpush1.msra.mxu0 0.0
        %619 = vmatprep.subr.mxu0 0.0
        %620 = vmatpush1.msra.mxu0 0.0
        %621 = vmatprep.subr.mxu0 0.0
        %622 = vmatpush1.msra.mxu0 0.0
        %623 = vmatprep.subr.mxu0 0.0
        %624 = vmatpush1.msra.mxu0 0.0
        %625 = vmatprep.subr.mxu0 0.0
        %626 = vmatpush1.msra.mxu0 0.0
        %627 = vmatprep.subr.mxu0 0.0
        %628 = vmatpush1.msra.mxu0 0.0
        %629 = vmatprep.subr.mxu0 0.0
        %630 = vmatpush1.msra.mxu0 0.0
        %631 = vmatprep.subr.mxu0 0.0
        %632 = vmatpush1.msra.mxu0 0.0
        %633 = vmatprep.subr.mxu0 0.0
        %634 = vmatpush1.msra.mxu0 0.0
        %635 = vmatprep.subr.mxu0 0.0
        %636 = vmatpush1.msra.mxu0 0.0
        %637 = vmatprep.subr.mxu0 0.0
        %638 = vmatpush1.msra.mxu0 0.0
        %639 = vmatprep.subr.mxu0 0.0
        %640 = vmatpush1.msra.mxu0 0.0
        %641 = vmatprep.subr.mxu0 0.0
        %642 = vmatpush1.msra.mxu0 0.0
        %643 = vmatprep.subr.mxu0 0.0
        %644 = vmatpush1.msra.mxu0 0.0
        %645 = vmatprep.subr.mxu0 0.0
        %646 = vmatpush1.msra.mxu0 0.0
        %647 = vmatprep.subr.mxu0 0.0
        %648 = vmatpush1.msra.mxu0 0.0
        %649 = vmatprep.subr.mxu0 0.0
        %650 = vmatpush1.msra.mxu0 0.0
        %651 = vmatprep.subr.mxu0 0.0
        %652 = vmatpush1.msra.mxu0 0.0
        %653 = vmatprep.subr.mxu0 0.0
        %654 = vmatpush1.msra.mxu0 0.0
        %655 = vmatprep.subr.mxu0 0.0
        %656 = vmatpush1.msra.mxu0 0.0
        %657 = vmatprep.subr.mxu0 0.0
        %658 = vmatpush1.msra.mxu0 0.0
        %659 = vmatprep.subr.mxu0 0.0
        %660 = vmatpush1.msra.mxu0 0.0
        %661 = vmatprep.subr.mxu0 0.0
        %662 = vmatpush1.msra.mxu0 0.0
        %663 = vmatprep.subr.mxu0 0.0
        %664 = vmatpush1.msra.mxu0 0.0
        %665 = vmatprep.subr.mxu0 0.0
        %666 = vmatpush1.msra.mxu0 0.0
        %667 = vmatprep.subr.mxu0 0.0
        %668 = vmatpush1.msra.mxu0 0.0
        %669 = vmatprep.mubr.f32.mxu0 0.0
        %670 = vmatmul.mubr.f32.gmra.mrb[0].mxu0 %v594
        %v671 = vpop.f32.mrb[0].mxu0
        %v672 = vadd.f32 %v591, %v671
        %v673 = vpop.f32.mrb[0].mxu0
        %674 = vmatprep.mubr.f32.mxu0 0.0
        %675 = vmatmul.mubr.f32.gmra.mrb[0].mxu0 %v597
        %v676 = vpop.f32.mrb[0].mxu0
        %v677 = vadd.f32 %v591, %v676
        %v678 = vpop.f32.mrb[0].mxu0
        %679 = vmatprep.mubr.f32.mxu0 0.0
        %680 = vmatmul.mubr.f32.gmra.mrb[0].mxu0 %v600
        %v681 = vpop.f32.mrb[0].mxu0
        %v682 = vadd.f32 %v591, %v681
        %v683 = vpop.f32.mrb[0].mxu0
        %684 = vmatprep.mubr.f32.mxu0 0.0
        %685 = vmatmul.mubr.f32.gmra.mrb[0].mxu0 %v603
        %v686 = vpop.f32.mrb[0].mxu0
        %v687 = vadd.f32 %v591, %v686
        %v688 = vpop.f32.mrb[0].mxu0
        %689 = vdwg.mxu0
        %v690 = vxor.u32 %v672, 2147483648
        %v691 = vxor.u32 %v677, 2147483648
        %v692 = vxor.u32 %v682, 2147483648
        %v693 = vxor.u32 %v687, 2147483648
        %v694 = vmul.f32 %v690, 1.442695
        %v695 = vpow.pop %v694
        %v696 = vmul.f32 %v691, 1.442695
        %v697 = vpow.pop %v696
        %v698 = vmul.f32 %v692, 1.442695
        %v699 = vpow.pop %v698
        %v700 = vmul.f32 %v693, 1.442695
        %v701 = vpow.pop %v700
        %v702 = vadd.f32 %v695, 1.0
        %v703 = vadd.f32 %v697, 1.0
        %v704 = vadd.f32 %v699, 1.0
        %v705 = vadd.f32 %v701, 1.0
        %v706 = vrcp.pop %v702
        %v707 = vmul.f32 1.0, %v706
        %v708 = vrcp.pop %v703
        %v709 = vmul.f32 1.0, %v708
        %v710 = vrcp.pop %v704
        %v711 = vmul.f32 1.0, %v710
        %v712 = vrcp.pop %v705
        %v713 = vmul.f32 1.0, %v712
        %714 = vxpose.xlu0.b32.start [1/16] %v707, 128
        %715 = vxpose.xlu0.b32.cont [2/16] %v709, 128
        %716 = vxpose.xlu0.b32.cont [3/16] 0.0, 128
        %717 = vxpose.xlu0.b32.cont [4/16] 0.0, 128
        %718 = vxpose.xlu0.b32.cont [5/16] 0.0, 128
        %719 = vxpose.xlu0.b32.cont [6/16] 0.0, 128
        %720 = vxpose.xlu0.b32.cont [7/16] 0.0, 128
        %721 = vxpose.xlu0.b32.cont [8/16] 0.0, 128
        %722 = vxpose.xlu0.b32.cont [9/16] 0.0, 128
        %723 = vxpose.xlu0.b32.cont [10/16] 0.0, 128
        %724 = vxpose.xlu0.b32.cont [11/16] 0.0, 128
        %725 = vxpose.xlu0.b32.cont [12/16] 0.0, 128
        %726 = vxpose.xlu0.b32.cont [13/16] 0.0, 128
        %727 = vxpose.xlu0.b32.cont [14/16] 0.0, 128
        %728 = vxpose.xlu0.b32.cont [15/16] 0.0, 128
        %729 = vxpose.xlu0.b32.end [16/16] 0.0, 128
        %v730 = vpop.trf.xlu0
        %v731 = vpop.trf.xlu0
        %v732 = vpop.trf.xlu0
        %v733 = vpop.trf.xlu0
        %v734 = vpop.trf.xlu0
        %v735 = vpop.trf.xlu0
        %v736 = vpop.trf.xlu0
        %v737 = vpop.trf.xlu0
        %v738 = vpop.trf.xlu0
        %v739 = vpop.trf.xlu0
        %v740 = vpop.trf.xlu0
        %v741 = vpop.trf.xlu0
        %v742 = vpop.trf.xlu0
        %v743 = vpop.trf.xlu0
        %v744 = vpop.trf.xlu0
        %v745 = vpop.trf.xlu0
        %748 = vrot.lane.b32.xlu0 %v711, 120
        %v749 = vpop.permute.xlu0 %748
        %750 = vrot.lane.b32.xlu0 %v713, 120
        %v751 = vpop.permute.xlu0 %750
        %754 = vxpose.xlu0.b32.start [1/16] %v749, 128
        %755 = vxpose.xlu0.b32.cont [2/16] %v751, 128
        %756 = vxpose.xlu0.b32.cont [3/16] 0.0, 128
        %757 = vxpose.xlu0.b32.cont [4/16] 0.0, 128
        %758 = vxpose.xlu0.b32.cont [5/16] 0.0, 128
        %759 = vxpose.xlu0.b32.cont [6/16] 0.0, 128
        %760 = vxpose.xlu0.b32.cont [7/16] 0.0, 128
        %761 = vxpose.xlu0.b32.cont [8/16] 0.0, 128
        %762 = vxpose.xlu0.b32.cont [9/16] 0.0, 128
        %763 = vxpose.xlu0.b32.cont [10/16] 0.0, 128
        %764 = vxpose.xlu0.b32.cont [11/16] 0.0, 128
        %765 = vxpose.xlu0.b32.cont [12/16] 0.0, 128
        %766 = vxpose.xlu0.b32.cont [13/16] 0.0, 128
        %767 = vxpose.xlu0.b32.cont [14/16] 0.0, 128
        %768 = vxpose.xlu0.b32.cont [15/16] 0.0, 128
        %769 = vxpose.xlu0.b32.end [16/16] 0.0, 128
        %v770 = vpop.trf.xlu0
        %v771 = vpop.trf.xlu0
        %v772 = vpop.trf.xlu0
        %v773 = vpop.trf.xlu0
        %v774 = vpop.trf.xlu0
        %v775 = vpop.trf.xlu0
        %v776 = vpop.trf.xlu0
        %v777 = vpop.trf.xlu0
        %v778 = vpop.trf.xlu0
        %v779 = vpop.trf.xlu0
        %v780 = vpop.trf.xlu0
        %v781 = vpop.trf.xlu0
        %v782 = vpop.trf.xlu0
        %v783 = vpop.trf.xlu0
        %v784 = vpop.trf.xlu0
        %v785 = vpop.trf.xlu0
        %v786 = vld [vmem:[%s3] sm:$0xff]
        %v787 = vld [vmem:[%s3 + $0x8] sm:$0xff]
        %v788 = vld [vmem:[%s3 + $0x10] sm:$0xff]
        %v789 = vld [vmem:[%s3 + $0x18] sm:$0xff]
        %vm790 = vcmask 130048
        %v792 = vsel %vm790, %v730, 0
        %794 = vmatprep.subr.mxu0 %v787
        %795 = vmatpush1.msra.mxu0 %v786
        %796 = vmatprep.subr.mxu0 %v789
        %797 = vmatpush1.msra.mxu0 %v788
        %798 = vmatprep.subr.mxu0 0.0
        %799 = vmatpush1.msra.mxu0 0.0
        %800 = vmatprep.subr.mxu0 0.0
        %801 = vmatpush1.msra.mxu0 0.0
        %802 = vmatprep.subr.mxu0 0.0
        %803 = vmatpush1.msra.mxu0 0.0
        %804 = vmatprep.subr.mxu0 0.0
        %805 = vmatpush1.msra.mxu0 0.0
        %806 = vmatprep.subr.mxu0 0.0
        %807 = vmatpush1.msra.mxu0 0.0
        %808 = vmatprep.subr.mxu0 0.0
        %809 = vmatpush1.msra.mxu0 0.0
        %810 = vmatprep.subr.mxu0 0.0
        %811 = vmatpush1.msra.mxu0 0.0
        %812 = vmatprep.subr.mxu0 0.0
        %813 = vmatpush1.msra.mxu0 0.0
        %814 = vmatprep.subr.mxu0 0.0
        %815 = vmatpush1.msra.mxu0 0.0
        %816 = vmatprep.subr.mxu0 0.0
        %817 = vmatpush1.msra.mxu0 0.0
        %818 = vmatprep.subr.mxu0 0.0
        %819 = vmatpush1.msra.mxu0 0.0
        %820 = vmatprep.subr.mxu0 0.0
        %821 = vmatpush1.msra.mxu0 0.0
        %822 = vmatprep.subr.mxu0 0.0
        %823 = vmatpush1.msra.mxu0 0.0
        %824 = vmatprep.subr.mxu0 0.0
        %825 = vmatpush1.msra.mxu0 0.0
        %826 = vmatprep.subr.mxu0 0.0
        %827 = vmatpush1.msra.mxu0 0.0
        %828 = vmatprep.subr.mxu0 0.0
        %829 = vmatpush1.msra.mxu0 0.0
        %830 = vmatprep.subr.mxu0 0.0
        %831 = vmatpush1.msra.mxu0 0.0
        %832 = vmatprep.subr.mxu0 0.0
        %833 = vmatpush1.msra.mxu0 0.0
        %834 = vmatprep.subr.mxu0 0.0
        %835 = vmatpush1.msra.mxu0 0.0
        %836 = vmatprep.subr.mxu0 0.0
        %837 = vmatpush1.msra.mxu0 0.0
        %838 = vmatprep.subr.mxu0 0.0
        %839 = vmatpush1.msra.mxu0 0.0
        %840 = vmatprep.subr.mxu0 0.0
        %841 = vmatpush1.msra.mxu0 0.0
        %842 = vmatprep.subr.mxu0 0.0
        %843 = vmatpush1.msra.mxu0 0.0
        %844 = vmatprep.subr.mxu0 0.0
        %845 = vmatpush1.msra.mxu0 0.0
        %846 = vmatprep.subr.mxu0 0.0
        %847 = vmatpush1.msra.mxu0 0.0
        %848 = vmatprep.subr.mxu0 0.0
        %849 = vmatpush1.msra.mxu0 0.0
        %850 = vmatprep.subr.mxu0 0.0
        %851 = vmatpush1.msra.mxu0 0.0
        %852 = vmatprep.subr.mxu0 0.0
        %853 = vmatpush1.msra.mxu0 0.0
        %854 = vmatprep.subr.mxu0 0.0
        %855 = vmatpush1.msra.mxu0 0.0
        %856 = vmatprep.subr.mxu0 0.0
        %857 = vmatpush1.msra.mxu0 0.0
        %858 = vmatprep.mubr.f32.mxu0 0.0
        %859 = vmatmul.mubr.f32.gmra.mrb[0].mxu0 %v792
        %v860 = vpop.f32.mrb[0].mxu0
        %v861 = vadd.f32 0.0, %v860
        %v862 = vpop.f32.mrb[0].mxu0
        %v863 = vadd.f32 0.0, %v862
        %864 = vdwg.mxu0
        %v865 = vmul.f32 %v331, %v861
        %v866 = vmul.f32 %v332, %v863
        %v867 = vld [vmem:[%s4] sm:$0xff]
        %v868 = vld [vmem:[%s4 + $0x8] sm:$0xff]
        %v869 = vld [vmem:[%s4 + $0x10] sm:$0xff]
        %v870 = vld [vmem:[%s4 + $0x18] sm:$0xff]
        %v872 = vsel %vm790, %v770, 0
        %874 = vmatprep.subr.mxu0 %v868
        %875 = vmatpush1.msra.mxu0 %v867
        %876 = vmatprep.subr.mxu0 %v870
        %877 = vmatpush1.msra.mxu0 %v869
        %878 = vmatprep.subr.mxu0 0.0
        %879 = vmatpush1.msra.mxu0 0.0
        %880 = vmatprep.subr.mxu0 0.0
        %881 = vmatpush1.msra.mxu0 0.0
        %882 = vmatprep.subr.mxu0 0.0
        %883 = vmatpush1.msra.mxu0 0.0
        %884 = vmatprep.subr.mxu0 0.0
        %885 = vmatpush1.msra.mxu0 0.0
        %886 = vmatprep.subr.mxu0 0.0
        %887 = vmatpush1.msra.mxu0 0.0
        %888 = vmatprep.subr.mxu0 0.0
        %889 = vmatpush1.msra.mxu0 0.0
        %890 = vmatprep.subr.mxu0 0.0
        %891 = vmatpush1.msra.mxu0 0.0
        %892 = vmatprep.subr.mxu0 0.0
        %893 = vmatpush1.msra.mxu0 0.0
        %894 = vmatprep.subr.mxu0 0.0
        %895 = vmatpush1.msra.mxu0 0.0
        %896 = vmatprep.subr.mxu0 0.0
        %897 = vmatpush1.msra.mxu0 0.0
        %898 = vmatprep.subr.mxu0 0.0
        %899 = vmatpush1.msra.mxu0 0.0
        %900 = vmatprep.subr.mxu0 0.0
        %901 = vmatpush1.msra.mxu0 0.0
        %902 = vmatprep.subr.mxu0 0.0
        %903 = vmatpush1.msra.mxu0 0.0
        %904 = vmatprep.subr.mxu0 0.0
        %905 = vmatpush1.msra.mxu0 0.0
        %906 = vmatprep.subr.mxu0 0.0
        %907 = vmatpush1.msra.mxu0 0.0
        %908 = vmatprep.subr.mxu0 0.0
        %909 = vmatpush1.msra.mxu0 0.0
        %910 = vmatprep.subr.mxu0 0.0
        %911 = vmatpush1.msra.mxu0 0.0
        %912 = vmatprep.subr.mxu0 0.0
        %913 = vmatpush1.msra.mxu0 0.0
        %914 = vmatprep.subr.mxu0 0.0
        %915 = vmatpush1.msra.mxu0 0.0
        %916 = vmatprep.subr.mxu0 0.0
        %917 = vmatpush1.msra.mxu0 0.0
        %918 = vmatprep.subr.mxu0 0.0
        %919 = vmatpush1.msra.mxu0 0.0
        %920 = vmatprep.subr.mxu0 0.0
        %921 = vmatpush1.msra.mxu0 0.0
        %922 = vmatprep.subr.mxu0 0.0
        %923 = vmatpush1.msra.mxu0 0.0
        %924 = vmatprep.subr.mxu0 0.0
        %925 = vmatpush1.msra.mxu0 0.0
        %926 = vmatprep.subr.mxu0 0.0
        %927 = vmatpush1.msra.mxu0 0.0
        %928 = vmatprep.subr.mxu0 0.0
        %929 = vmatpush1.msra.mxu0 0.0
        %930 = vmatprep.subr.mxu0 0.0
        %931 = vmatpush1.msra.mxu0 0.0
        %932 = vmatprep.subr.mxu0 0.0
        %933 = vmatpush1.msra.mxu0 0.0
        %934 = vmatprep.subr.mxu0 0.0
        %935 = vmatpush1.msra.mxu0 0.0
        %936 = vmatprep.subr.mxu0 0.0
        %937 = vmatpush1.msra.mxu0 0.0
        %938 = vmatprep.mubr.f32.mxu0 0.0
        %939 = vmatmul.mubr.f32.gmra.mrb[0].mxu0 %v872
        %v940 = vpop.f32.mrb[0].mxu0
        %v941 = vadd.f32 0.0, %v940
        %v942 = vpop.f32.mrb[0].mxu0
        %v943 = vadd.f32 0.0, %v942
        %944 = vdwg.mxu0
        %v945 = vmul.f32 %v865, %v941
        %v946 = vmul.f32 %v866, %v943
        %947 = vst [vmem:[%s325] sm:$0xff] %v945
        %948 = vst [vmem:[%s325 + $0x8] sm:$0xff] %v946
        %s949 = sand.u32 %s225, 1
        %s950 = scalar_lea.sflag [#allocation3], %s949
        %s951 = sand.u32 %s225, 1
        %s952 = smul.addr %s951, 16
        %s953 = scalar_lea.vmem [#allocation2], %s952
        // Predicated region
        $region57: #{tpu_custom_call.1} parent=55 // pred_check
          %p954 = pneg %p235
        $region58: #{tpu_custom_call.1} parent=55 // pred_check_branch
          %956 = sbr.rel (%p954) target = $region60
        $region59: #{tpu_custom_call.1} parent=55 // pred_region
          %s958 = ssub.s32 256, 256
          %959 = vsyncadd %s950, %s958
          %s960 = smul.addr %s23, 2
          %s961 = smul.addr %s960, 128
          %s962 = scalar_lea.hbm %s9, %s961
          %s964 = sshll.u32 %s953, 4
          %s965 = int_to_ptr.vmem [resolvable:$true] %s964
          %967 = dma.vmem_to_hbm [thread:$0]  %s965, 256, %s962, %s950
        $region60: #{tpu_custom_call.1} parent=55 // pred_fallthru
          _
      $region56: #{tpu_custom_call.1} parent=5 // pred_fallthru
        _
      %p968 = scmp.le.s32.totalorder 2, %s18
      // Predicated region
      $region61: #{tpu_custom_call.1} parent=5 // pred_check
        %p969 = pneg %p968
      $region62: #{tpu_custom_call.1} parent=5 // pred_check_branch
        %971 = sbr.rel (%p969) target = $region64
      $region63: #{tpu_custom_call.1} parent=5 // pred_region
        %s972 = ssub.s32 %s18, 2
        // Predicated region
        $region65: #{tpu_custom_call.1} parent=63 // pred_check
          %p973 = pneg %p241
        $region66: #{tpu_custom_call.1} parent=63 // pred_check_branch
          %975 = sbr.rel (%p973) target = $region68
        $region67: #{tpu_custom_call.1} parent=63 // pred_region
          %s976 = sand.u32 %s226, 1
          %s977 = scalar_lea.sflag [#allocation3], %s976
          %s978 = sand.u32 %s226, 1
          %s979 = smul.addr %s978, 16
          %s980 = scalar_lea.vmem [#allocation2], %s979
          %981 = dma.done %s977, 256
        $region68: #{tpu_custom_call.1} parent=63 // pred_fallthru
          _
      $region64: #{tpu_custom_call.1} parent=5 // pred_fallthru
        _
    $region6: #{tpu_custom_call.1} parent=1 // loop_footer
      %s22 = sadd.s32 1, %s18
    $region7: #{tpu_custom_call.1} parent=1 // loop_footer_branch
      %17 = sbr.rel target = $region3
    $region8: #{tpu_custom_call.1} parent=1 // loop_exit
      _
    %982 = vsyncpa [#allocation3], 1
    %s983 = scalar_lea.sflag [#allocation3], 1
    %984 = vsyncpa %s983, 1

// kernel: tpu_custom_call.1
$region0: #{tpu_custom_call.1}
  #allocation0 [shape = 'u32[]', space=smem, size = 0x4, offset = 0x4, fixed_abs, tag = 'smem constant byte address 0x4 - core index']
  #allocation1 [shape = 'u32[144,128]{1,0:T(1,128)}', space=vmem, size = 0x12000, scoped, tag = 'internal scratch']
  %s0 = inlined_call_operand.vmem [shape: f32[16,256], index: 0, kind: input, shape index: {}]
  %s1 = inlined_call_operand.vmem [shape: f32[256,32], index: 1, kind: input, shape index: {}]
  %s2 = inlined_call_operand.vmem [shape: f32[1,32], index: 2, kind: input, shape index: {}]
  %s3 = inlined_call_operand.vmem [shape: f32[16,256], index: 3, kind: input, shape index: {}]
  %s4 = inlined_call_operand.vmem [shape: f32[16,256], index: 4, kind: input, shape index: {}]
  %s5 = inlined_call_operand.vmem [shape: f32[8,8], index: 5, kind: input, shape index: {}]
  %s6 = inlined_call_operand.vmem [shape: f32[1,8], index: 6, kind: input, shape index: {}]
  %s7 = inlined_call_operand.vmem [shape: f32[8,16], index: 7, kind: input, shape index: {}]
  %s8 = inlined_call_operand.vmem [shape: f32[1,16], index: 8, kind: input, shape index: {}]
  %s9 = inlined_call_operand.hbm [shape: f32[16,256], index: 9, kind: output, shape index: {}]
  %s10 = sld [smem:[#allocation0]]
  $region69: #{tpu_custom_call.1} parent=0
    _
  %s12 = ssub.s32 1, %s10
  %s13 = scalar_select 0, %s12, %s10
  $region1: #{tpu_custom_call.1} parent=0
    #allocation2 [shape = 'u8[16384]{0}', space=vmem, size = 0x4000, scoped, tag = 'output window, operand 0']
    #allocation3 [shape = 's32[2]{0}', space=sflag, size = 0x8, scoped, tag = 'scoped memory for tpu_custom_call.1']
    %14 = vsyncpa [#allocation3], 0
    %s15 = scalar_lea.sflag [#allocation3], 1
    %16 = vsyncpa %s15, 0
    loop: start=0, step=1, limit=4
    $region2: #{tpu_custom_call.1} parent=1 // loop_pre_header
      _
    $region3: #{tpu_custom_call.1} parent=1 // loop_header
      %s18 = sphi 0, %s22
      %p19 = scmp.ge.s32.totalorder %s18, 4
      %s28 = sphi 0, %s30
      %s31 = sphi 0, %s28
      %s32 = sphi 0, %s31
      %s48 = sphi 0, %s32
      %s52 = sphi 0, %s52
      %s54 = sphi 0, %s52
      %s55 = sphi 0, %s54
      %s69 = sphi 0, %s55
      %s73 = sphi 0, %s73
      %s75 = sphi 0, %s73
      %s76 = sphi 0, %s75
      %s90 = sphi 0, %s76
      %s94 = sphi 0, %s94
      %s96 = sphi 0, %s94
      %s97 = sphi 0, %s96
      %s111 = sphi 0, %s97
      %s115 = sphi 0, %s115
      %s117 = sphi 0, %s115
      %s118 = sphi 0, %s117
      %s132 = sphi 0, %s118
      %s136 = sphi 0, %s136
      %s138 = sphi 0, %s136
      %s139 = sphi 0, %s138
      %s153 = sphi 0, %s139
      %s157 = sphi 0, %s157
      %s159 = sphi 0, %s157
      %s160 = sphi 0, %s159
      %s174 = sphi 0, %s160
      %s178 = sphi 0, %s178
      %s180 = sphi 0, %s178
      %s181 = sphi 0, %s180
      %s195 = sphi 0, %s181
      %s199 = sphi 0, %s199
      %s201 = sphi 0, %s199
      %s202 = sphi 0, %s201
      %s216 = sphi 0, %s202
      %s222 = sphi 0, %s224
      %s225 = sphi 0, %s222
      %s226 = sphi 0, %s225
      %s242 = sphi 0, %s226
    $region4: #{tpu_custom_call.1} parent=1 // loop_header_branch
      %21 = sbr.rel (%p19) target = $region8
    $region5: #{tpu_custom_call.1} parent=1 // loop_body
      %s23 = ssub.s32 %s18, 1
      %s24 = ssub.s32 %s18, 2
      %s25 = sadd.s32 %s18, 1
      %s26 = ssub.s32 %s18, %s25
      %p27 = scmp.eq.s32.totalorder %s26, 0
      %s29 = sadd.s32 %s28, 1
      %s30 = scalar_select %p27, %s28, %s29
      %p33 = pneg %p27
      %p34 = scmp.eq.s32.totalorder %s18, 1
      %p35 = por %p33, %p34
      %p36 = scmp.ne.s32.totalorder %s28, %s31
      %p37 = scmp.eq.s32.totalorder %s18, 0
      %p38 = por %p36, %p37
      %p39 = scmp.ne.s32.totalorder %s28, %s31
      %p40 = scmp.eq.s32.totalorder %s23, 1
      %p41 = por %p39, %p40
      %p42 = scmp.ne.s32.totalorder %s31, %s32
      %p43 = scmp.eq.s32.totalorder %s23, 0
      %p44 = por %p42, %p43
      %p45 = scmp.ne.s32.totalorder %s31, %s32
      %p46 = scmp.eq.s32.totalorder %s24, 1
      %p47 = por %p45, %p46
      %p49 = scmp.ne.s32.totalorder %s32, %s48
      %p50 = scmp.eq.s32.totalorder %s24, 0
      %p51 = por %p49, %p50
      %s53 = sadd.s32 %s52, 1
      %p56 = scmp.eq.s32.totalorder %s18, 1
      %p57 = scmp.ne.s32.totalorder %s52, %s54
      %p58 = scmp.eq.s32.totalorder %s18, 0
      %p59 = por %p57, %p58
      %p60 = scmp.ne.s32.totalorder %s52, %s54
      %p61 = scmp.eq.s32.totalorder %s23, 1
      %p62 = por %p60, %p61
      %p63 = scmp.ne.s32.totalorder %s54, %s55
      %p64 = scmp.eq.s32.totalorder %s23, 0
      %p65 = por %p63, %p64
      %p66 = scmp.ne.s32.totalorder %s54, %s55
      %p67 = scmp.eq.s32.totalorder %s24, 1
      %p68 = por %p66, %p67
      %p70 = scmp.ne.s32.totalorder %s55, %s69
      %p71 = scmp.eq.s32.totalorder %s24, 0
      %p72 = por %p70, %p71
      %s74 = sadd.s32 %s73, 1
      %p77 = scmp.eq.s32.totalorder %s18, 1
      %p78 = scmp.ne.s32.totalorder %s73, %s75
      %p79 = scmp.eq.s32.totalorder %s18, 0
      %p80 = por %p78, %p79
      %p81 = scmp.ne.s32.totalorder %s73, %s75
      %p82 = scmp.eq.s32.totalorder %s23, 1
      %p83 = por %p81, %p82
      %p84 = scmp.ne.s32.totalorder %s75, %s76
      %p85 = scmp.eq.s32.totalorder %s23, 0
      %p86 = por %p84, %p85
      %p87 = scmp.ne.s32.totalorder %s75, %s76
      %p88 = scmp.eq.s32.totalorder %s24, 1
      %p89 = por %p87, %p88
      %p91 = scmp.ne.s32.totalorder %s76, %s90
      %p92 = scmp.eq.s32.totalorder %s24, 0
      %p93 = por %p91, %p92
      %s95 = sadd.s32 %s94, 1
      %p98 = scmp.eq.s32.totalorder %s18, 1
      %p99 = scmp.ne.s32.totalorder %s94, %s96
      %p100 = scmp.eq.s32.totalorder %s18, 0
      %p101 = por %p99, %p100
      %p102 = scmp.ne.s32.totalorder %s94, %s96
      %p103 = scmp.eq.s32.totalorder %s23, 1
      %p104 = por %p102, %p103
      %p105 = scmp.ne.s32.totalorder %s96, %s97
      %p106 = scmp.eq.s32.totalorder %s23, 0
      %p107 = por %p105, %p106
      %p108 = scmp.ne.s32.totalorder %s96, %s97
      %p109 = scmp.eq.s32.totalorder %s24, 1
      %p110 = por %p108, %p109
      %p112 = scmp.ne.s32.totalorder %s97, %s111
      %p113 = scmp.eq.s32.totalorder %s24, 0
      %p114 = por %p112, %p113
      %s116 = sadd.s32 %s115, 1
      %p119 = scmp.eq.s32.totalorder %s18, 1
      %p120 = scmp.ne.s32.totalorder %s115, %s117
      %p121 = scmp.eq.s32.totalorder %s18, 0
      %p122 = por %p120, %p121
      %p123 = scmp.ne.s32.totalorder %s115, %s117
      %p124 = scmp.eq.s32.totalorder %s23, 1
      %p125 = por %p123, %p124
      %p126 = scmp.ne.s32.totalorder %s117, %s118
      %p127 = scmp.eq.s32.totalorder %s23, 0
      %p128 = por %p126, %p127
      %p129 = scmp.ne.s32.totalorder %s117, %s118
      %p130 = scmp.eq.s32.totalorder %s24, 1
      %p131 = por %p129, %p130
      %p133 = scmp.ne.s32.totalorder %s118, %s132
      %p134 = scmp.eq.s32.totalorder %s24, 0
      %p135 = por %p133, %p134
      %s137 = sadd.s32 %s136, 1
      %p140 = scmp.eq.s32.totalorder %s18, 1
      %p141 = scmp.ne.s32.totalorder %s136, %s138
      %p142 = scmp.eq.s32.totalorder %s18, 0
      %p143 = por %p141, %p142
      %p144 = scmp.ne.s32.totalorder %s136, %s138
      %p145 = scmp.eq.s32.totalorder %s23, 1
      %p146 = por %p144, %p145
      %p147 = scmp.ne.s32.totalorder %s138, %s139
      %p148 = scmp.eq.s32.totalorder %s23, 0
      %p149 = por %p147, %p148
      %p150 = scmp.ne.s32.totalorder %s138, %s139
      %p151 = scmp.eq.s32.totalorder %s24, 1
      %p152 = por %p150, %p151
      %p154 = scmp.ne.s32.totalorder %s139, %s153
      %p155 = scmp.eq.s32.totalorder %s24, 0
      %p156 = por %p154, %p155
      %s158 = sadd.s32 %s157, 1
      %p161 = scmp.eq.s32.totalorder %s18, 1
      %p162 = scmp.ne.s32.totalorder %s157, %s159
      %p163 = scmp.eq.s32.totalorder %s18, 0
      %p164 = por %p162, %p163
      %p165 = scmp.ne.s32.totalorder %s157, %s159
      %p166 = scmp.eq.s32.totalorder %s23, 1
      %p167 = por %p165, %p166
      %p168 = scmp.ne.s32.totalorder %s159, %s160
      %p169 = scmp.eq.s32.totalorder %s23, 0
      %p170 = por %p168, %p169
      %p171 = scmp.ne.s32.totalorder %s159, %s160
      %p172 = scmp.eq.s32.totalorder %s24, 1
      %p173 = por %p171, %p172
      %p175 = scmp.ne.s32.totalorder %s160, %s174
      %p176 = scmp.eq.s32.totalorder %s24, 0
      %p177 = por %p175, %p176
      %s179 = sadd.s32 %s178, 1
      %p182 = scmp.eq.s32.totalorder %s18, 1
      %p183 = scmp.ne.s32.totalorder %s178, %s180
      %p184 = scmp.eq.s32.totalorder %s18, 0
      %p185 = por %p183, %p184
      %p186 = scmp.ne.s32.totalorder %s178, %s180
      %p187 = scmp.eq.s32.totalorder %s23, 1
      %p188 = por %p186, %p187
      %p189 = scmp.ne.s32.totalorder %s180, %s181
      %p190 = scmp.eq.s32.totalorder %s23, 0
      %p191 = por %p189, %p190
      %p192 = scmp.ne.s32.totalorder %s180, %s181
      %p193 = scmp.eq.s32.totalorder %s24, 1
      %p194 = por %p192, %p193
      %p196 = scmp.ne.s32.totalorder %s181, %s195
      %p197 = scmp.eq.s32.totalorder %s24, 0
      %p198 = por %p196, %p197
      %s200 = sadd.s32 %s199, 1
      %p203 = scmp.eq.s32.totalorder %s18, 1
      %p204 = scmp.ne.s32.totalorder %s199, %s201
      %p205 = scmp.eq.s32.totalorder %s18, 0
      %p206 = por %p204, %p205
      %p207 = scmp.ne.s32.totalorder %s199, %s201
      %p208 = scmp.eq.s32.totalorder %s23, 1
      %p209 = por %p207, %p208
      %p210 = scmp.ne.s32.totalorder %s201, %s202
      %p211 = scmp.eq.s32.totalorder %s23, 0
      %p212 = por %p210, %p211
      %p213 = scmp.ne.s32.totalorder %s201, %s202
      %p214 = scmp.eq.s32.totalorder %s24, 1
      %p215 = por %p213, %p214
      %p217 = scmp.ne.s32.totalorder %s202, %s216
      %p218 = scmp.eq.s32.totalorder %s24, 0
      %p219 = por %p217, %p218
      %s220 = ssub.s32 %s18, %s25
      %p221 = scmp.eq.s32.totalorder %s220, 0
      %s223 = sadd.s32 %s222, 1
      %s224 = scalar_select %p221, %s222, %s223
      %p227 = pneg %p221
      %p228 = scmp.eq.s32.totalorder %s18, 1
      %p229 = por %p227, %p228
      %p230 = scmp.ne.s32.totalorder %s222, %s225
      %p231 = scmp.eq.s32.totalorder %s18, 0
      %p232 = por %p230, %p231
      %p233 = scmp.ne.s32.totalorder %s222, %s225
      %p234 = scmp.eq.s32.totalorder %s23, 1
      %p235 = por %p233, %p234
      %p236 = scmp.ne.s32.totalorder %s225, %s226
      %p237 = scmp.eq.s32.totalorder %s23, 0
      %p238 = por %p236, %p237
      %p239 = scmp.ne.s32.totalorder %s225, %s226
      %p240 = scmp.eq.s32.totalorder %s24, 1
      %p241 = por %p239, %p240
      %p243 = scmp.ne.s32.totalorder %s226, %s242
      %p244 = scmp.eq.s32.totalorder %s24, 0
      %p245 = por %p243, %p244
      %p246 = scmp.le.s32.totalorder 1, %s18
      %p247 = scmp.lt.s32.totalorder %s18, 3
      %p248 = pnand %p246, %p247
      %p249 = pneg %p248
      // Predicated region
      $region9: #{tpu_custom_call.1} parent=5 // pred_check
        _
      $region10: #{tpu_custom_call.1} parent=5 // pred_check_branch
        %251 = sbr.rel (%p248) target = $region12
      $region11: #{tpu_custom_call.1} parent=5 // pred_region
        %s252 = ssub.s32 %s18, 1
        // Predicated region
        $region13: #{tpu_custom_call.1} parent=11 // pred_check
          %p253 = pneg %p65
        $region14: #{tpu_custom_call.1} parent=11 // pred_check_branch
          %255 = sbr.rel (%p253) target = $region16
        $region15: #{tpu_custom_call.1} parent=11 // pred_region
          _
        $region16: #{tpu_custom_call.1} parent=11 // pred_fallthru
          _
        // Predicated region
        $region17: #{tpu_custom_call.1} parent=11 // pred_check
          %p256 = pneg %p86
        $region18: #{tpu_custom_call.1} parent=11 // pred_check_branch
          %258 = sbr.rel (%p256) target = $region20
        $region19: #{tpu_custom_call.1} parent=11 // pred_region
          _
        $region20: #{tpu_custom_call.1} parent=11 // pred_fallthru
          _
        // Predicated region
        $region21: #{tpu_custom_call.1} parent=11 // pred_check
          %p259 = pneg %p107
        $region22: #{tpu_custom_call.1} parent=11 // pred_check_branch
          %261 = sbr.rel (%p259) target = $region24
        $region23: #{tpu_custom_call.1} parent=11 // pred_region
          _
        $region24: #{tpu_custom_call.1} parent=11 // pred_fallthru
          _
        // Predicated region
        $region25: #{tpu_custom_call.1} parent=11 // pred_check
          %p262 = pneg %p128
        $region26: #{tpu_custom_call.1} parent=11 // pred_check_branch
          %264 = sbr.rel (%p262) target = $region28
        $region27: #{tpu_custom_call.1} parent=11 // pred_region
          _
        $region28: #{tpu_custom_call.1} parent=11 // pred_fallthru
          _
        // Predicated region
        $region29: #{tpu_custom_call.1} parent=11 // pred_check
          %p265 = pneg %p149
        $region30: #{tpu_custom_call.1} parent=11 // pred_check_branch
          %267 = sbr.rel (%p265) target = $region32
        $region31: #{tpu_custom_call.1} parent=11 // pred_region
          _
        $region32: #{tpu_custom_call.1} parent=11 // pred_fallthru
          _
        // Predicated region
        $region33: #{tpu_custom_call.1} parent=11 // pred_check
          %p268 = pneg %p170
        $region34: #{tpu_custom_call.1} parent=11 // pred_check_branch
          %270 = sbr.rel (%p268) target = $region36
        $region35: #{tpu_custom_call.1} parent=11 // pred_region
          _
        $region36: #{tpu_custom_call.1} parent=11 // pred_fallthru
          _
        // Predicated region
        $region37: #{tpu_custom_call.1} parent=11 // pred_check
          %p271 = pneg %p191
        $region38: #{tpu_custom_call.1} parent=11 // pred_check_branch
          %273 = sbr.rel (%p271) target = $region40
        $region39: #{tpu_custom_call.1} parent=11 // pred_region
          _
        $region40: #{tpu_custom_call.1} parent=11 // pred_fallthru
          _
        // Predicated region
        $region41: #{tpu_custom_call.1} parent=11 // pred_check
          %p274 = pneg %p212
        $region42: #{tpu_custom_call.1} parent=11 // pred_check_branch
          %276 = sbr.rel (%p274) target = $region44
        $region43: #{tpu_custom_call.1} parent=11 // pred_region
          _
        $region44: #{tpu_custom_call.1} parent=11 // pred_fallthru
          _
      $region12: #{tpu_custom_call.1} parent=5 // pred_fallthru
        _
      %p277 = scmp.lt.s32.totalorder %s18, 2
      // Predicated region
      $region45: #{tpu_custom_call.1} parent=5 // pred_check
        %p278 = pneg %p277
      $region46: #{tpu_custom_call.1} parent=5 // pred_check_branch
        %280 = sbr.rel (%p278) target = $region48
      $region47: #{tpu_custom_call.1} parent=5 // pred_region
        // Predicated region
        $region49: #{tpu_custom_call.1} parent=47 // pred_check
          %p281 = pneg %p38
        $region50: #{tpu_custom_call.1} parent=47 // pred_check_branch
          %283 = sbr.rel (%p281) target = $region52
        $region51: #{tpu_custom_call.1} parent=47 // pred_region
          %p284 = scmp.lt.s32.totalorder %s18, 1
          %s285 = scalar_select %p284, %s18, 1
          %s286 = smul.addr %s285, 2
          %s287 = smul.addr %s286, 8
          %s288 = scalar_lea.vmem %s0, %s287
        $region52: #{tpu_custom_call.1} parent=47 // pred_fallthru
          _
      $region48: #{tpu_custom_call.1} parent=5 // pred_fallthru
        _
      %p289 = scmp.le.s32.totalorder 1, %s18
      %p290 = scmp.lt.s32.totalorder %s18, 3
      %p291 = pnand %p289, %p290
      %p292 = pneg %p291
      // Predicated region
      $region53: #{tpu_custom_call.1} parent=5 // pred_check
        _
      $region54: #{tpu_custom_call.1} parent=5 // pred_check_branch
        %294 = sbr.rel (%p291) target = $region56
      $region55: #{tpu_custom_call.1} parent=5 // pred_region
        %s295 = ssub.s32 %s18, 1
        %p296 = scmp.lt.s32.totalorder %s23, 1
        %s297 = scalar_select %p296, %s23, 1
        %s298 = smul.addr %s297, 2
        %s299 = smul.addr %s298, 8
        %s300 = scalar_lea.vmem %s0, %s299
        %p301 = pneg %p44
        %p302 = pneg %p41
        %p303 = pneg %p65
        %p304 = pneg %p62
        %p305 = pneg %p86
        %p306 = pneg %p83
        %p307 = pneg %p107
        %p308 = pneg %p104
        %p309 = pneg %p128
        %p310 = pneg %p125
        %p311 = pneg %p149
        %p312 = pneg %p146
        %p313 = pneg %p170
        %p314 = pneg %p167
        %p315 = pneg %p191
        %p316 = pneg %p188
        %p317 = pneg %p212
        %p318 = pneg %p209
        %p319 = pneg %p238
        %p320 = pneg %p235
        %s321 = sand.u32 %s225, 1
        %s322 = scalar_lea.sflag [#allocation3], %s321
        %s323 = sand.u32 %s225, 1
        %s324 = smul.addr %s323, 16
        %s325 = scalar_lea.vmem [#allocation2], %s324
        %p326 = scmp.lt.s32.totalorder %s23, 1
        %s327 = scalar_select %p326, %s23, 1
        %s328 = smul.addr %s327, 2
        %s329 = smul.addr %s328, 8
        %s330 = scalar_lea.vmem %s0, %s329
        %v331 = vld [vmem:[%s330] sm:$0xff]
        %v332 = vld [vmem:[%s330 + $0x8] sm:$0xff]
        %v333 = vld [vmem:[%s1] sm:$0xff]
        %v334 = vld [vmem:[%s1 + $0x8] sm:$0xff]
        %v335 = vld [vmem:[%s1 + $0x10] sm:$0xff]
        %v336 = vld [vmem:[%s1 + $0x18] sm:$0xff]
        %v337 = vld [vmem:[%s1 + $0x20] sm:$0xff]
        %v338 = vld [vmem:[%s1 + $0x28] sm:$0xff]
        %v339 = vld [vmem:[%s1 + $0x30] sm:$0xff]
        %v340 = vld [vmem:[%s1 + $0x38] sm:$0xff]
        %v341 = vld [vmem:[%s1 + $0x40] sm:$0xff]
        %v342 = vld [vmem:[%s1 + $0x48] sm:$0xff]
        %v343 = vld [vmem:[%s1 + $0x50] sm:$0xff]
        %v344 = vld [vmem:[%s1 + $0x58] sm:$0xff]
        %v345 = vld [vmem:[%s1 + $0x60] sm:$0xff]
        %v346 = vld [vmem:[%s1 + $0x68] sm:$0xff]
        %v347 = vld [vmem:[%s1 + $0x70] sm:$0xff]
        %v348 = vld [vmem:[%s1 + $0x78] sm:$0xff]
        %v349 = vld [vmem:[%s1 + $0x80] sm:$0xff]
        %v350 = vld [vmem:[%s1 + $0x88] sm:$0xff]
        %v351 = vld [vmem:[%s1 + $0x90] sm:$0xff]
        %v352 = vld [vmem:[%s1 + $0x98] sm:$0xff]
        %v353 = vld [vmem:[%s1 + $0xa0] sm:$0xff]
        %v354 = vld [vmem:[%s1 + $0xa8] sm:$0xff]
        %v355 = vld [vmem:[%s1 + $0xb0] sm:$0xff]
        %v356 = vld [vmem:[%s1 + $0xb8] sm:$0xff]
        %v357 = vld [vmem:[%s1 + $0xc0] sm:$0xff]
        %v358 = vld [vmem:[%s1 + $0xc8] sm:$0xff]
        %v359 = vld [vmem:[%s1 + $0xd0] sm:$0xff]
        %v360 = vld [vmem:[%s1 + $0xd8] sm:$0xff]
        %v361 = vld [vmem:[%s1 + $0xe0] sm:$0xff]
        %v362 = vld [vmem:[%s1 + $0xe8] sm:$0xff]
        %v363 = vld [vmem:[%s1 + $0xf0] sm:$0xff]
        %v364 = vld [vmem:[%s1 + $0xf8] sm:$0xff]
        %365 = vmatprep.subr.mxu0 0.0
        %366 = vmatpush1.msra.mxu0 %v333
        %367 = vmatprep.subr.mxu0 0.0
        %368 = vmatpush1.msra.mxu0 %v334
        %369 = vmatprep.subr.mxu0 0.0
        %370 = vmatpush1.msra.mxu0 %v335
        %371 = vmatprep.subr.mxu0 0.0
        %372 = vmatpush1.msra.mxu0 %v336
        %373 = vmatprep.subr.mxu0 0.0
        %374 = vmatpush1.msra.mxu0 %v337
        %375 = vmatprep.subr.mxu0 0.0
        %376 = vmatpush1.msra.mxu0 %v338
        %377 = vmatprep.subr.mxu0 0.0
        %378 = vmatpush1.msra.mxu0 %v339
        %379 = vmatprep.subr.mxu0 0.0
        %380 = vmatpush1.msra.mxu0 %v340
        %381 = vmatprep.subr.mxu0 0.0
        %382 = vmatpush1.msra.mxu0 %v341
        %383 = vmatprep.subr.mxu0 0.0
        %384 = vmatpush1.msra.mxu0 %v342
        %385 = vmatprep.subr.mxu0 0.0
        %386 = vmatpush1.msra.mxu0 %v343
        %387 = vmatprep.subr.mxu0 0.0
        %388 = vmatpush1.msra.mxu0 %v344
        %389 = vmatprep.subr.mxu0 0.0
        %390 = vmatpush1.msra.mxu0 %v345
        %391 = vmatprep.subr.mxu0 0.0
        %392 = vmatpush1.msra.mxu0 %v346
        %393 = vmatprep.subr.mxu0 0.0
        %394 = vmatpush1.msra.mxu0 %v347
        %395 = vmatprep.subr.mxu0 0.0
        %396 = vmatpush1.msra.mxu0 %v348
        %397 = vmatprep.subr.mxu0 0.0
        %398 = vmatpush1.msra.mxu0 %v349
        %399 = vmatprep.subr.mxu0 0.0
        %400 = vmatpush1.msra.mxu0 %v350
        %401 = vmatprep.subr.mxu0 0.0
        %402 = vmatpush1.msra.mxu0 %v351
        %403 = vmatprep.subr.mxu0 0.0
        %404 = vmatpush1.msra.mxu0 %v352
        %405 = vmatprep.subr.mxu0 0.0
        %406 = vmatpush1.msra.mxu0 %v353
        %407 = vmatprep.subr.mxu0 0.0
        %408 = vmatpush1.msra.mxu0 %v354
        %409 = vmatprep.subr.mxu0 0.0
        %410 = vmatpush1.msra.mxu0 %v355
        %411 = vmatprep.subr.mxu0 0.0
        %412 = vmatpush1.msra.mxu0 %v356
        %413 = vmatprep.subr.mxu0 0.0
        %414 = vmatpush1.msra.mxu0 %v357
        %415 = vmatprep.subr.mxu0 0.0
        %416 = vmatpush1.msra.mxu0 %v358
        %417 = vmatprep.subr.mxu0 0.0
        %418 = vmatpush1.msra.mxu0 %v359
        %419 = vmatprep.subr.mxu0 0.0
        %420 = vmatpush1.msra.mxu0 %v360
        %421 = vmatprep.subr.mxu0 0.0
        %422 = vmatpush1.msra.mxu0 %v361
        %423 = vmatprep.subr.mxu0 0.0
        %424 = vmatpush1.msra.mxu0 %v362
        %425 = vmatprep.subr.mxu0 0.0
        %426 = vmatpush1.msra.mxu0 %v363
        %427 = vmatprep.subr.mxu0 0.0
        %428 = vmatpush1.msra.mxu0 %v364
        %429 = vmatprep.mubr.f32.mxu0 %v332
        %430 = vmatmul.mubr.f32.gmra.mrb[0].mxu0 %v331
        %v431 = vpop.f32.mrb[0].mxu0
        %v432 = vadd.f32 0.0, %v431
        %v433 = vpop.f32.mrb[0].mxu0
        %434 = vdwg.mxu0
        %v435 = vld [vmem:[%s2] sm:$0x1]
        %v437 = vlaneseq
        %v438 = vshrl.u32 %v437, 7
        %v439 = vsub.s32 0, %v438
        %v440 = vrot.slane %v435, %v439
        %v442 = vmul.f32 %v432, %v440
        %v443 = vld [vmem:[%s5] sm:$0xff]
        %v444 = vld [vmem:[%s6] sm:$0x1]
        %v446 = vlaneseq
        %v447 = vshrl.u32 %v446, 7
        %v448 = vsub.s32 0, %v447
        %v449 = vrot.slane %v444, %v448
        %451 = vxpose.xlu0.b32.start [1/16] %v442, 128
        %452 = vxpose.xlu0.b32.cont [2/16] 0.0, 128
        %453 = vxpose.xlu0.b32.cont [3/16] 0.0, 128
        %454 = vxpose.xlu0.b32.cont [4/16] 0.0, 128
        %455 = vxpose.xlu0.b32.cont [5/16] 0.0, 128
        %456 = vxpose.xlu0.b32.cont [6/16] 0.0, 128
        %457 = vxpose.xlu0.b32.cont [7/16] 0.0, 128
        %458 = vxpose.xlu0.b32.cont [8/16] 0.0, 128
        %459 = vxpose.xlu0.b32.cont [9/16] 0.0, 128
        %460 = vxpose.xlu0.b32.cont [10/16] 0.0, 128
        %461 = vxpose.xlu0.b32.cont [11/16] 0.0, 128
        %462 = vxpose.xlu0.b32.cont [12/16] 0.0, 128
        %463 = vxpose.xlu0.b32.cont [13/16] 0.0, 128
        %464 = vxpose.xlu0.b32.cont [14/16] 0.0, 128
        %465 = vxpose.xlu0.b32.cont [15/16] 0.0, 128
        %466 = vxpose.xlu0.b32.end [16/16] 0.0, 128
        %v467 = vpop.trf.xlu0
        %v468 = vpop.trf.xlu0
        %v469 = vpop.trf.xlu0
        %v470 = vpop.trf.xlu0
        %v471 = vpop.trf.xlu0
        %v472 = vpop.trf.xlu0
        %v473 = vpop.trf.xlu0
        %v474 = vpop.trf.xlu0
        %v475 = vpop.trf.xlu0
        %v476 = vpop.trf.xlu0
        %v477 = vpop.trf.xlu0
        %v478 = vpop.trf.xlu0
        %v479 = vpop.trf.xlu0
        %v480 = vpop.trf.xlu0
        %v481 = vpop.trf.xlu0
        %v482 = vpop.trf.xlu0
        %vm483 = vcmask 64512
        %v485 = vsel %vm483, %v467, 0
        %v488 = vsel %vm483, %v468, 0
        %v491 = vsel %vm483, %v469, 0
        %v494 = vsel %vm483, %v470, 0
        %496 = vmatprep.subr.mxu0 0.0
        %497 = vmatpush1.msra.mxu0 %v443
        %498 = vmatprep.subr.mxu0 0.0
        %499 = vmatpush1.msra.mxu0 0.0
        %500 = vmatprep.subr.mxu0 0.0
        %501 = vmatpush1.msra.mxu0 0.0
        %502 = vmatprep.subr.mxu0 0.0
        %503 = vmatpush1.msra.mxu0 0.0
        %504 = vmatprep.subr.mxu0 0.0
        %505 = vmatpush1.msra.mxu0 0.0
        %506 = vmatprep.subr.mxu0 0.0
        %507 = vmatpush1.msra.mxu0 0.0
        %508 = vmatprep.subr.mxu0 0.0
        %509 = vmatpush1.msra.mxu0 0.0
        %510 = vmatprep.subr.mxu0 0.0
        %511 = vmatpush1.msra.mxu0 0.0
        %512 = vmatprep.subr.mxu0 0.0
        %513 = vmatpush1.msra.mxu0 0.0
        %514 = vmatprep.subr.mxu0 0.0
        %515 = vmatpush1.msra.mxu0 0.0
        %516 = vmatprep.subr.mxu0 0.0
        %517 = vmatpush1.msra.mxu0 0.0
        %518 = vmatprep.subr.mxu0 0.0
        %519 = vmatpush1.msra.mxu0 0.0
        %520 = vmatprep.subr.mxu0 0.0
        %521 = vmatpush1.msra.mxu0 0.0
        %522 = vmatprep.subr.mxu0 0.0
        %523 = vmatpush1.msra.mxu0 0.0
        %524 = vmatprep.subr.mxu0 0.0
        %525 = vmatpush1.msra.mxu0 0.0
        %526 = vmatprep.subr.mxu0 0.0
        %527 = vmatpush1.msra.mxu0 0.0
        %528 = vmatprep.subr.mxu0 0.0
        %529 = vmatpush1.msra.mxu0 0.0
        %530 = vmatprep.subr.mxu0 0.0
        %531 = vmatpush1.msra.mxu0 0.0
        %532 = vmatprep.subr.mxu0 0.0
        %533 = vmatpush1.msra.mxu0 0.0
        %534 = vmatprep.subr.mxu0 0.0
        %535 = vmatpush1.msra.mxu0 0.0
        %536 = vmatprep.subr.mxu0 0.0
        %537 = vmatpush1.msra.mxu0 0.0
        %538 = vmatprep.subr.mxu0 0.0
        %539 = vmatpush1.msra.mxu0 0.0
        %540 = vmatprep.subr.mxu0 0.0
        %541 = vmatpush1.msra.mxu0 0.0
        %542 = vmatprep.subr.mxu0 0.0
        %543 = vmatpush1.msra.mxu0 0.0
        %544 = vmatprep.subr.mxu0 0.0
        %545 = vmatpush1.msra.mxu0 0.0
        %546 = vmatprep.subr.mxu0 0.0
        %547 = vmatpush1.msra.mxu0 0.0
        %548 = vmatprep.subr.mxu0 0.0
        %549 = vmatpush1.msra.mxu0 0.0
        %550 = vmatprep.subr.mxu0 0.0
        %551 = vmatpush1.msra.mxu0 0.0
        %552 = vmatprep.subr.mxu0 0.0
        %553 = vmatpush1.msra.mxu0 0.0
        %554 = vmatprep.subr.mxu0 0.0
        %555 = vmatpush1.msra.mxu0 0.0
        %556 = vmatprep.subr.mxu0 0.0
        %557 = vmatpush1.msra.mxu0 0.0
        %558 = vmatprep.subr.mxu0 0.0
        %559 = vmatpush1.msra.mxu0 0.0
        %560 = vmatprep.mubr.f32.mxu0 0.0
        %561 = vmatmul.mubr.f32.gmra.mrb[0].mxu0 %v485
        %v562 = vpop.f32.mrb[0].mxu0
        %v563 = vadd.f32 %v449, %v562
        %v564 = vpop.f32.mrb[0].mxu0
        %565 = vmatprep.mubr.f32.mxu0 0.0
        %566 = vmatmul.mubr.f32.gmra.mrb[0].mxu0 %v488
        %v567 = vpop.f32.mrb[0].mxu0
        %v568 = vadd.f32 %v449, %v567
        %v569 = vpop.f32.mrb[0].mxu0
        %570 = vmatprep.mubr.f32.mxu0 0.0
        %571 = vmatmul.mubr.f32.gmra.mrb[0].mxu0 %v491
        %v572 = vpop.f32.mrb[0].mxu0
        %v573 = vadd.f32 %v449, %v572
        %v574 = vpop.f32.mrb[0].mxu0
        %575 = vmatprep.mubr.f32.mxu0 0.0
        %576 = vmatmul.mubr.f32.gmra.mrb[0].mxu0 %v494
        %v577 = vpop.f32.mrb[0].mxu0
        %v578 = vadd.f32 %v449, %v577
        %v579 = vpop.f32.mrb[0].mxu0
        %580 = vdwg.mxu0
        %v581 = vmax.f32 %v563, 0.0
        %v582 = vmax.f32 %v568, 0.0
        %v583 = vmax.f32 %v573, 0.0
        %v584 = vmax.f32 %v578, 0.0
        %v585 = vld [vmem:[%s7] sm:$0xff]
        %v586 = vld [vmem:[%s8] sm:$0x1]
        %v588 = vlaneseq
        %v589 = vshrl.u32 %v588, 7
        %v590 = vsub.s32 0, %v589
        %v591 = vrot.slane %v586, %v590
        %v594 = vsel %vm483, %v581, 0
        %v597 = vsel %vm483, %v582, 0
        %v600 = vsel %vm483, %v583, 0
        %v603 = vsel %vm483, %v584, 0
        %605 = vmatprep.subr.mxu0 0.0
        %606 = vmatpush1.msra.mxu0 %v585
        %607 = vmatprep.subr.mxu0 0.0
        %608 = vmatpush1.msra.mxu0 0.0
        %609 = vmatprep.subr.mxu0 0.0
        %610 = vmatpush1.msra.mxu0 0.0
        %611 = vmatprep.subr.mxu0 0.0
        %612 = vmatpush1.msra.mxu0 0.0
        %613 = vmatprep.subr.mxu0 0.0
        %614 = vmatpush1.msra.mxu0 0.0
        %615 = vmatprep.subr.mxu0 0.0
        %616 = vmatpush1.msra.mxu0 0.0
        %617 = vmatprep.subr.mxu0 0.0
        %618 = vmatpush1.msra.mxu0 0.0
        %619 = vmatprep.subr.mxu0 0.0
        %620 = vmatpush1.msra.mxu0 0.0
        %621 = vmatprep.subr.mxu0 0.0
        %622 = vmatpush1.msra.mxu0 0.0
        %623 = vmatprep.subr.mxu0 0.0
        %624 = vmatpush1.msra.mxu0 0.0
        %625 = vmatprep.subr.mxu0 0.0
        %626 = vmatpush1.msra.mxu0 0.0
        %627 = vmatprep.subr.mxu0 0.0
        %628 = vmatpush1.msra.mxu0 0.0
        %629 = vmatprep.subr.mxu0 0.0
        %630 = vmatpush1.msra.mxu0 0.0
        %631 = vmatprep.subr.mxu0 0.0
        %632 = vmatpush1.msra.mxu0 0.0
        %633 = vmatprep.subr.mxu0 0.0
        %634 = vmatpush1.msra.mxu0 0.0
        %635 = vmatprep.subr.mxu0 0.0
        %636 = vmatpush1.msra.mxu0 0.0
        %637 = vmatprep.subr.mxu0 0.0
        %638 = vmatpush1.msra.mxu0 0.0
        %639 = vmatprep.subr.mxu0 0.0
        %640 = vmatpush1.msra.mxu0 0.0
        %641 = vmatprep.subr.mxu0 0.0
        %642 = vmatpush1.msra.mxu0 0.0
        %643 = vmatprep.subr.mxu0 0.0
        %644 = vmatpush1.msra.mxu0 0.0
        %645 = vmatprep.subr.mxu0 0.0
        %646 = vmatpush1.msra.mxu0 0.0
        %647 = vmatprep.subr.mxu0 0.0
        %648 = vmatpush1.msra.mxu0 0.0
        %649 = vmatprep.subr.mxu0 0.0
        %650 = vmatpush1.msra.mxu0 0.0
        %651 = vmatprep.subr.mxu0 0.0
        %652 = vmatpush1.msra.mxu0 0.0
        %653 = vmatprep.subr.mxu0 0.0
        %654 = vmatpush1.msra.mxu0 0.0
        %655 = vmatprep.subr.mxu0 0.0
        %656 = vmatpush1.msra.mxu0 0.0
        %657 = vmatprep.subr.mxu0 0.0
        %658 = vmatpush1.msra.mxu0 0.0
        %659 = vmatprep.subr.mxu0 0.0
        %660 = vmatpush1.msra.mxu0 0.0
        %661 = vmatprep.subr.mxu0 0.0
        %662 = vmatpush1.msra.mxu0 0.0
        %663 = vmatprep.subr.mxu0 0.0
        %664 = vmatpush1.msra.mxu0 0.0
        %665 = vmatprep.subr.mxu0 0.0
        %666 = vmatpush1.msra.mxu0 0.0
        %667 = vmatprep.subr.mxu0 0.0
        %668 = vmatpush1.msra.mxu0 0.0
        %669 = vmatprep.mubr.f32.mxu0 0.0
        %670 = vmatmul.mubr.f32.gmra.mrb[0].mxu0 %v594
        %v671 = vpop.f32.mrb[0].mxu0
        %v672 = vadd.f32 %v591, %v671
        %v673 = vpop.f32.mrb[0].mxu0
        %674 = vmatprep.mubr.f32.mxu0 0.0
        %675 = vmatmul.mubr.f32.gmra.mrb[0].mxu0 %v597
        %v676 = vpop.f32.mrb[0].mxu0
        %v677 = vadd.f32 %v591, %v676
        %v678 = vpop.f32.mrb[0].mxu0
        %679 = vmatprep.mubr.f32.mxu0 0.0
        %680 = vmatmul.mubr.f32.gmra.mrb[0].mxu0 %v600
        %v681 = vpop.f32.mrb[0].mxu0
        %v682 = vadd.f32 %v591, %v681
        %v683 = vpop.f32.mrb[0].mxu0
        %684 = vmatprep.mubr.f32.mxu0 0.0
        %685 = vmatmul.mubr.f32.gmra.mrb[0].mxu0 %v603
        %v686 = vpop.f32.mrb[0].mxu0
        %v687 = vadd.f32 %v591, %v686
        %v688 = vpop.f32.mrb[0].mxu0
        %689 = vdwg.mxu0
        %v690 = vxor.u32 %v672, 2147483648
        %v691 = vxor.u32 %v677, 2147483648
        %v692 = vxor.u32 %v682, 2147483648
        %v693 = vxor.u32 %v687, 2147483648
        %v694 = vmul.f32 %v690, 1.442695
        %v695 = vpow.pop %v694
        %v696 = vmul.f32 %v691, 1.442695
        %v697 = vpow.pop %v696
        %v698 = vmul.f32 %v692, 1.442695
        %v699 = vpow.pop %v698
        %v700 = vmul.f32 %v693, 1.442695
        %v701 = vpow.pop %v700
        %v702 = vadd.f32 %v695, 1.0
        %v703 = vadd.f32 %v697, 1.0
        %v704 = vadd.f32 %v699, 1.0
        %v705 = vadd.f32 %v701, 1.0
        %v706 = vrcp.pop %v702
        %v707 = vmul.f32 1.0, %v706
        %v708 = vrcp.pop %v703
        %v709 = vmul.f32 1.0, %v708
        %v710 = vrcp.pop %v704
        %v711 = vmul.f32 1.0, %v710
        %v712 = vrcp.pop %v705
        %v713 = vmul.f32 1.0, %v712
        %714 = vxpose.xlu0.b32.start [1/16] %v707, 128
        %715 = vxpose.xlu0.b32.cont [2/16] %v709, 128
        %716 = vxpose.xlu0.b32.cont [3/16] 0.0, 128
        %717 = vxpose.xlu0.b32.cont [4/16] 0.0, 128
        %718 = vxpose.xlu0.b32.cont [5/16] 0.0, 128
        %719 = vxpose.xlu0.b32.cont [6/16] 0.0, 128
        %720 = vxpose.xlu0.b32.cont [7/16] 0.0, 128
        %721 = vxpose.xlu0.b32.cont [8/16] 0.0, 128
        %722 = vxpose.xlu0.b32.cont [9/16] 0.0, 128
        %723 = vxpose.xlu0.b32.cont [10/16] 0.0, 128
        %724 = vxpose.xlu0.b32.cont [11/16] 0.0, 128
        %725 = vxpose.xlu0.b32.cont [12/16] 0.0, 128
        %726 = vxpose.xlu0.b32.cont [13/16] 0.0, 128
        %727 = vxpose.xlu0.b32.cont [14/16] 0.0, 128
        %728 = vxpose.xlu0.b32.cont [15/16] 0.0, 128
        %729 = vxpose.xlu0.b32.end [16/16] 0.0, 128
        %v730 = vpop.trf.xlu0
        %v731 = vpop.trf.xlu0
        %v732 = vpop.trf.xlu0
        %v733 = vpop.trf.xlu0
        %v734 = vpop.trf.xlu0
        %v735 = vpop.trf.xlu0
        %v736 = vpop.trf.xlu0
        %v737 = vpop.trf.xlu0
        %v738 = vpop.trf.xlu0
        %v739 = vpop.trf.xlu0
        %v740 = vpop.trf.xlu0
        %v741 = vpop.trf.xlu0
        %v742 = vpop.trf.xlu0
        %v743 = vpop.trf.xlu0
        %v744 = vpop.trf.xlu0
        %v745 = vpop.trf.xlu0
        %748 = vrot.lane.b32.xlu0 %v711, 120
        %v749 = vpop.permute.xlu0 %748
        %750 = vrot.lane.b32.xlu0 %v713, 120
        %v751 = vpop.permute.xlu0 %750
        %754 = vxpose.xlu0.b32.start [1/16] %v749, 128
        %755 = vxpose.xlu0.b32.cont [2/16] %v751, 128
        %756 = vxpose.xlu0.b32.cont [3/16] 0.0, 128
        %757 = vxpose.xlu0.b32.cont [4/16] 0.0, 128
        %758 = vxpose.xlu0.b32.cont [5/16] 0.0, 128
        %759 = vxpose.xlu0.b32.cont [6/16] 0.0, 128
        %760 = vxpose.xlu0.b32.cont [7/16] 0.0, 128
        %761 = vxpose.xlu0.b32.cont [8/16] 0.0, 128
        %762 = vxpose.xlu0.b32.cont [9/16] 0.0, 128
        %763 = vxpose.xlu0.b32.cont [10/16] 0.0, 128
        %764 = vxpose.xlu0.b32.cont [11/16] 0.0, 128
        %765 = vxpose.xlu0.b32.cont [12/16] 0.0, 128
        %766 = vxpose.xlu0.b32.cont [13/16] 0.0, 128
        %767 = vxpose.xlu0.b32.cont [14/16] 0.0, 128
        %768 = vxpose.xlu0.b32.cont [15/16] 0.0, 128
        %769 = vxpose.xlu0.b32.end [16/16] 0.0, 128
        %v770 = vpop.trf.xlu0
        %v771 = vpop.trf.xlu0
        %v772 = vpop.trf.xlu0
        %v773 = vpop.trf.xlu0
        %v774 = vpop.trf.xlu0
        %v775 = vpop.trf.xlu0
        %v776 = vpop.trf.xlu0
        %v777 = vpop.trf.xlu0
        %v778 = vpop.trf.xlu0
        %v779 = vpop.trf.xlu0
        %v780 = vpop.trf.xlu0
        %v781 = vpop.trf.xlu0
        %v782 = vpop.trf.xlu0
        %v783 = vpop.trf.xlu0
        %v784 = vpop.trf.xlu0
        %v785 = vpop.trf.xlu0
        %v786 = vld [vmem:[%s3] sm:$0xff]
        %v787 = vld [vmem:[%s3 + $0x8] sm:$0xff]
        %v788 = vld [vmem:[%s3 + $0x10] sm:$0xff]
        %v789 = vld [vmem:[%s3 + $0x18] sm:$0xff]
        %vm790 = vcmask 130048
        %v792 = vsel %vm790, %v730, 0
        %794 = vmatprep.subr.mxu0 %v787
        %795 = vmatpush1.msra.mxu0 %v786
        %796 = vmatprep.subr.mxu0 %v789
        %797 = vmatpush1.msra.mxu0 %v788
        %798 = vmatprep.subr.mxu0 0.0
        %799 = vmatpush1.msra.mxu0 0.0
        %800 = vmatprep.subr.mxu0 0.0
        %801 = vmatpush1.msra.mxu0 0.0
        %802 = vmatprep.subr.mxu0 0.0
        %803 = vmatpush1.msra.mxu0 0.0
        %804 = vmatprep.subr.mxu0 0.0
        %805 = vmatpush1.msra.mxu0 0.0
        %806 = vmatprep.subr.mxu0 0.0
        %807 = vmatpush1.msra.mxu0 0.0
        %808 = vmatprep.subr.mxu0 0.0
        %809 = vmatpush1.msra.mxu0 0.0
        %810 = vmatprep.subr.mxu0 0.0
        %811 = vmatpush1.msra.mxu0 0.0
        %812 = vmatprep.subr.mxu0 0.0
        %813 = vmatpush1.msra.mxu0 0.0
        %814 = vmatprep.subr.mxu0 0.0
        %815 = vmatpush1.msra.mxu0 0.0
        %816 = vmatprep.subr.mxu0 0.0
        %817 = vmatpush1.msra.mxu0 0.0
        %818 = vmatprep.subr.mxu0 0.0
        %819 = vmatpush1.msra.mxu0 0.0
        %820 = vmatprep.subr.mxu0 0.0
        %821 = vmatpush1.msra.mxu0 0.0
        %822 = vmatprep.subr.mxu0 0.0
        %823 = vmatpush1.msra.mxu0 0.0
        %824 = vmatprep.subr.mxu0 0.0
        %825 = vmatpush1.msra.mxu0 0.0
        %826 = vmatprep.subr.mxu0 0.0
        %827 = vmatpush1.msra.mxu0 0.0
        %828 = vmatprep.subr.mxu0 0.0
        %829 = vmatpush1.msra.mxu0 0.0
        %830 = vmatprep.subr.mxu0 0.0
        %831 = vmatpush1.msra.mxu0 0.0
        %832 = vmatprep.subr.mxu0 0.0
        %833 = vmatpush1.msra.mxu0 0.0
        %834 = vmatprep.subr.mxu0 0.0
        %835 = vmatpush1.msra.mxu0 0.0
        %836 = vmatprep.subr.mxu0 0.0
        %837 = vmatpush1.msra.mxu0 0.0
        %838 = vmatprep.subr.mxu0 0.0
        %839 = vmatpush1.msra.mxu0 0.0
        %840 = vmatprep.subr.mxu0 0.0
        %841 = vmatpush1.msra.mxu0 0.0
        %842 = vmatprep.subr.mxu0 0.0
        %843 = vmatpush1.msra.mxu0 0.0
        %844 = vmatprep.subr.mxu0 0.0
        %845 = vmatpush1.msra.mxu0 0.0
        %846 = vmatprep.subr.mxu0 0.0
        %847 = vmatpush1.msra.mxu0 0.0
        %848 = vmatprep.subr.mxu0 0.0
        %849 = vmatpush1.msra.mxu0 0.0
        %850 = vmatprep.subr.mxu0 0.0
        %851 = vmatpush1.msra.mxu0 0.0
        %852 = vmatprep.subr.mxu0 0.0
        %853 = vmatpush1.msra.mxu0 0.0
        %854 = vmatprep.subr.mxu0 0.0
        %855 = vmatpush1.msra.mxu0 0.0
        %856 = vmatprep.subr.mxu0 0.0
        %857 = vmatpush1.msra.mxu0 0.0
        %858 = vmatprep.mubr.f32.mxu0 0.0
        %859 = vmatmul.mubr.f32.gmra.mrb[0].mxu0 %v792
        %v860 = vpop.f32.mrb[0].mxu0
        %v861 = vadd.f32 0.0, %v860
        %v862 = vpop.f32.mrb[0].mxu0
        %v863 = vadd.f32 0.0, %v862
        %864 = vdwg.mxu0
        %v865 = vmul.f32 %v331, %v861
        %v866 = vmul.f32 %v332, %v863
        %v867 = vld [vmem:[%s4] sm:$0xff]
        %v868 = vld [vmem:[%s4 + $0x8] sm:$0xff]
        %v869 = vld [vmem:[%s4 + $0x10] sm:$0xff]
        %v870 = vld [vmem:[%s4 + $0x18] sm:$0xff]
        %v872 = vsel %vm790, %v770, 0
        %874 = vmatprep.subr.mxu0 %v868
        %875 = vmatpush1.msra.mxu0 %v867
        %876 = vmatprep.subr.mxu0 %v870
        %877 = vmatpush1.msra.mxu0 %v869
        %878 = vmatprep.subr.mxu0 0.0
        %879 = vmatpush1.msra.mxu0 0.0
        %880 = vmatprep.subr.mxu0 0.0
        %881 = vmatpush1.msra.mxu0 0.0
        %882 = vmatprep.subr.mxu0 0.0
        %883 = vmatpush1.msra.mxu0 0.0
        %884 = vmatprep.subr.mxu0 0.0
        %885 = vmatpush1.msra.mxu0 0.0
        %886 = vmatprep.subr.mxu0 0.0
        %887 = vmatpush1.msra.mxu0 0.0
        %888 = vmatprep.subr.mxu0 0.0
        %889 = vmatpush1.msra.mxu0 0.0
        %890 = vmatprep.subr.mxu0 0.0
        %891 = vmatpush1.msra.mxu0 0.0
        %892 = vmatprep.subr.mxu0 0.0
        %893 = vmatpush1.msra.mxu0 0.0
        %894 = vmatprep.subr.mxu0 0.0
        %895 = vmatpush1.msra.mxu0 0.0
        %896 = vmatprep.subr.mxu0 0.0
        %897 = vmatpush1.msra.mxu0 0.0
        %898 = vmatprep.subr.mxu0 0.0
        %899 = vmatpush1.msra.mxu0 0.0
        %900 = vmatprep.subr.mxu0 0.0
        %901 = vmatpush1.msra.mxu0 0.0
        %902 = vmatprep.subr.mxu0 0.0
        %903 = vmatpush1.msra.mxu0 0.0
        %904 = vmatprep.subr.mxu0 0.0
        %905 = vmatpush1.msra.mxu0 0.0
        %906 = vmatprep.subr.mxu0 0.0
        %907 = vmatpush1.msra.mxu0 0.0
        %908 = vmatprep.subr.mxu0 0.0
        %909 = vmatpush1.msra.mxu0 0.0
        %910 = vmatprep.subr.mxu0 0.0
        %911 = vmatpush1.msra.mxu0 0.0
        %912 = vmatprep.subr.mxu0 0.0
        %913 = vmatpush1.msra.mxu0 0.0
        %914 = vmatprep.subr.mxu0 0.0
        %915 = vmatpush1.msra.mxu0 0.0
        %916 = vmatprep.subr.mxu0 0.0
        %917 = vmatpush1.msra.mxu0 0.0
        %918 = vmatprep.subr.mxu0 0.0
        %919 = vmatpush1.msra.mxu0 0.0
        %920 = vmatprep.subr.mxu0 0.0
        %921 = vmatpush1.msra.mxu0 0.0
        %922 = vmatprep.subr.mxu0 0.0
        %923 = vmatpush1.msra.mxu0 0.0
        %924 = vmatprep.subr.mxu0 0.0
        %925 = vmatpush1.msra.mxu0 0.0
        %926 = vmatprep.subr.mxu0 0.0
        %927 = vmatpush1.msra.mxu0 0.0
        %928 = vmatprep.subr.mxu0 0.0
        %929 = vmatpush1.msra.mxu0 0.0
        %930 = vmatprep.subr.mxu0 0.0
        %931 = vmatpush1.msra.mxu0 0.0
        %932 = vmatprep.subr.mxu0 0.0
        %933 = vmatpush1.msra.mxu0 0.0
        %934 = vmatprep.subr.mxu0 0.0
        %935 = vmatpush1.msra.mxu0 0.0
        %936 = vmatprep.subr.mxu0 0.0
        %937 = vmatpush1.msra.mxu0 0.0
        %938 = vmatprep.mubr.f32.mxu0 0.0
        %939 = vmatmul.mubr.f32.gmra.mrb[0].mxu0 %v872
        %v940 = vpop.f32.mrb[0].mxu0
        %v941 = vadd.f32 0.0, %v940
        %v942 = vpop.f32.mrb[0].mxu0
        %v943 = vadd.f32 0.0, %v942
        %944 = vdwg.mxu0
        %v945 = vmul.f32 %v865, %v941
        %v946 = vmul.f32 %v866, %v943
        %947 = vst [vmem:[%s325] sm:$0xff] %v945
        %948 = vst [vmem:[%s325 + $0x8] sm:$0xff] %v946
        %s949 = sand.u32 %s225, 1
        %s950 = scalar_lea.sflag [#allocation3], %s949
        %s951 = sand.u32 %s225, 1
        %s952 = smul.addr %s951, 16
        %s953 = scalar_lea.vmem [#allocation2], %s952
        // Predicated region
        $region57: #{tpu_custom_call.1} parent=55 // pred_check
          %p954 = pneg %p235
        $region58: #{tpu_custom_call.1} parent=55 // pred_check_branch
          %956 = sbr.rel (%p954) target = $region60
        $region59: #{tpu_custom_call.1} parent=55 // pred_region
          %s958 = ssub.s32 256, 256
          %959 = vsyncadd %s950, %s958
          %s960 = smul.addr %s23, 2
          %s961 = smul.addr %s960, 128
          %s962 = scalar_lea.hbm %s9, %s961
          %s964 = sshll.u32 %s953, 4
          %s965 = int_to_ptr.vmem [resolvable:$true] %s964
          %967 = dma.vmem_to_hbm [thread:$0]  %s965, 256, %s962, %s950
        $region60: #{tpu_custom_call.1} parent=55 // pred_fallthru
          _
      $region56: #{tpu_custom_call.1} parent=5 // pred_fallthru
        _
      %p968 = scmp.le.s32.totalorder 2, %s18
      // Predicated region
      $region61: #{tpu_custom_call.1} parent=5 // pred_check
        %p969 = pneg %p968
      $region62: #{tpu_custom_call.1} parent=5 // pred_check_branch
        %971 = sbr.rel (%p969) target = $region64
      $region63: #{tpu_custom_call.1} parent=5 // pred_region
        %s972 = ssub.s32 %s18, 2
        // Predicated region
        $region65: #{tpu_custom_call.1} parent=63 // pred_check
          %p973 = pneg %p241
        $region66: #{tpu_custom_call.1} parent=63 // pred_check_branch
          %975 = sbr.rel (%p973) target = $region68
        $region67: #{tpu_custom_call.1} parent=63 // pred_region
          %s976 = sand.u32 %s226, 1
          %s977 = scalar_lea.sflag [#allocation3], %s976
          %s978 = sand.u32 %s226, 1
          %s979 = smul.addr %s978, 16
          %s980 = scalar_lea.vmem [#allocation2], %s979
          %981 = dma.done %s977, 256
        $region68: #{tpu_custom_call.1} parent=63 // pred_fallthru
          _
      $region64: #{tpu_custom_call.1} parent=5 // pred_fallthru
        _
    $region6: #{tpu_custom_call.1} parent=1 // loop_footer
      %s22 = sadd.s32 1, %s18
    $region7: #{tpu_custom_call.1} parent=1 // loop_footer_branch
      %17 = sbr.rel target = $region3
    $region8: #{tpu_custom_call.1} parent=1 // loop_exit
      _
    %982 = vsyncpa [#allocation3], 1
    %s983 = scalar_lea.sflag [#allocation3], 1
    %984 = vsyncpa %s983, 1

</llo_original>
